<compile_context>
chip_gen: v7x
topology: tpu7x:2x2x1
jax: 0.10.0
libtpu: 0.0.40
codegen_flags: <defaults>
</compile_context>

<pallas_src>
import functools
import operator

import numpy as np
import jax
import jax.numpy as jnp
from jax import lax
from jax.experimental import pallas as pl
from jax.experimental.pallas import tpu as pltpu


def _prod(shape):
    return functools.reduce(operator.mul, shape, 1)


def _round_up(x, m):
    return (x + m - 1) // m * m


def _row_major_strides(shape):
    strides = []
    s = 1
    for d in reversed(shape):
        strides.insert(0, s)
        s *= d
    return strides


# ----------------------------------------------------------------------------
# Kernel 1: one-time tiled construction of the TRANSPOSED effective weights.
#   W_effT[l, m] = sum_f w[m, f] * [idx[m, f] == l]
# Inputs come in as (focus, RN): focus on sublanes, RN on lanes (dense).
# ----------------------------------------------------------------------------
def _build_wefft_kernel(idx_ref, w_ref, wefft_ref):
    # idx_ref  : (focus, TILE_RN) int32
    # w_ref    : (focus, TILE_RN) float32
    # wefft_ref: (TILE_L, TILE_RN) compute_dtype
    tile_l = wefft_ref.shape[0]
    focus = idx_ref.shape[0]
    l_off = pl.program_id(0) * tile_l
    # Small (TILE_L, 1) sublane iota offset by the L-tile start; the compare
    # broadcasts against (1, TILE_RN) index rows.
    sub = lax.broadcasted_iota(jnp.int32, (tile_l, 1), 0) + l_off

    acc = jnp.zeros(wefft_ref.shape, jnp.float32)          # f32 build (v5e-safe)
    for f in range(focus):                                  # focus is small; unrolled
        idx_f = idx_ref[f:f + 1, :]                         # (1, TILE_RN)
        w_f = w_ref[f:f + 1, :]                             # (1, TILE_RN)
        acc = acc + jnp.where(sub == idx_f, w_f, jnp.float32(0.0))
    wefft_ref[...] = acc.astype(wefft_ref.dtype)


# ----------------------------------------------------------------------------
# Kernel 2: tiled matmul + bias forward:  y = x @ W_effT + bias
# Grid = (B tiles [parallel], RN tiles [parallel], L tiles [arbitrary, last]).
# ----------------------------------------------------------------------------
def _matmul_bias_kernel(x_ref, w_ref, b_ref, o_ref, acc_ref):
    k = pl.program_id(2)

    @pl.when(k == 0)
    def _():
        acc_ref[...] = jnp.zeros_like(acc_ref)

    acc_ref[...] += jnp.dot(x_ref[...], w_ref[...],
                            preferred_element_type=jnp.float32)

    @pl.when(k == pl.num_programs(2) - 1)
    def _():
        o_ref[...] = (acc_ref[...] + b_ref[...].astype(jnp.float32)).astype(o_ref.dtype)


# ----------------------------------------------------------------------------
# Amortized precompute: build padded W_effT (bf16 by default) and padded bias.
# ----------------------------------------------------------------------------
def precompute_effective_params(connections_index, weights, bias, input_shape,
                                reuse_times, *, compute_dtype=jnp.bfloat16,
                                tile_rn=128, tile_l=256):
    L = _prod(input_shape)
    neurons, focus = weights.shape
    rn = reuse_times * neurons
    rn_pad = _round_up(rn, tile_rn)          # lane-dense output / weight dimension
    l_pad = _round_up(L, tile_l)

    idx = connections_index.reshape(rn, focus).astype(jnp.int32)
    # Weights are shared across reuse (broadcast over R in the torch forward);
    # replicate once here, at build time only — never per forward call.
    w_rep = jnp.broadcast_to(weights.astype(jnp.float32)[None],
                             (reuse_times, neurons, focus)).reshape(rn, focus)

    # (focus, RN) layout: focus on sublanes (small), RN on lanes (dense 128).
    idx_t = jnp.pad(idx.T, ((0, 0), (0, rn_pad - rn)))
    w_t = jnp.pad(w_rep.T, ((0, 0), (0, rn_pad - rn)))   # zero weights => zero pad cols

    itemsize = np.dtype(compute_dtype).itemsize
    grid = (l_pad // tile_l, rn_pad // tile_rn)
    w_efft = pl.pallas_call(
        _build_wefft_kernel,
        out_shape=jax.ShapeDtypeStruct((l_pad, rn_pad), compute_dtype),
        grid_spec=pltpu.PrefetchScalarGridSpec(
            num_scalar_prefetch=0,
            grid=grid,
            in_specs=[pl.BlockSpec((focus, tile_rn), lambda li, ri: (0, ri)),
                      pl.BlockSpec((focus, tile_rn), lambda li, ri: (0, ri))],
            out_specs=pl.BlockSpec((tile_l, tile_rn), lambda li, ri: (li, ri))),
        compiler_params=pltpu.CompilerParams(
            dimension_semantics=("parallel", "parallel"),
            vmem_limit_bytes=32 * 1024 * 1024),
        cost_estimate=pl.CostEstimate(
            flops=3 * focus * rn_pad * l_pad,
            transcendentals=0,
            bytes_accessed=int(idx_t.size * 4 + w_t.size * 4
                               + rn_pad * l_pad * itemsize)),
    )(idx_t, w_t)

    bias_rep = jnp.broadcast_to(bias.astype(jnp.float32)[None],
                                (reuse_times, neurons)).reshape(1, rn)
    bias_p = jnp.pad(bias_rep, ((0, 0), (0, rn_pad - rn)))

    return dict(w_efft=w_efft, bias=bias_p, rn=rn, rn_pad=rn_pad, L=L,
                l_pad=l_pad, tile_rn=tile_rn, tile_l=tile_l,
                compute_dtype=compute_dtype)


# ----------------------------------------------------------------------------
# Forward pass: tiled matmul y = x @ W_effT + bias, reshaped to
# (batch, reuse_times, *output_shape).
# ----------------------------------------------------------------------------
def limited_attention_forward(x, params, input_shape, output_shape, reuse_times):
    L, l_pad = params["L"], params["l_pad"]
    rn, rn_pad = params["rn"], params["rn_pad"]
    tile_rn, tile_l = params["tile_rn"], params["tile_l"]
    cdt = params["compute_dtype"]
    itemsize = np.dtype(cdt).itemsize

    if x.shape == tuple(input_shape):            # un-batched input case
        x = x[None]
    batch = x.shape[0]

    # Keep batch on sublanes (pad to the native sublane count for the dtype);
    # RN (large) stays on lanes so output stores are unmasked and lane-dense.
    tile_b = 8 * max(1, 4 // itemsize)           # 8 for f32, 16 for bf16
    b_pad = _round_up(batch, tile_b)

    x_flat = x.reshape(batch, L).astype(cdt)
    x_p = jnp.pad(x_flat, ((0, b_pad - batch), (0, l_pad - L)))

    grid = (b_pad // tile_b, rn_pad // tile_rn, l_pad // tile_l)
    y = pl.pallas_call(
        _matmul_bias_kernel,
        out_shape=jax.ShapeDtypeStruct((b_pad, rn_pad), jnp.float32),
        grid_spec=pltpu.PrefetchScalarGridSpec(
            num_scalar_prefetch=0,
            grid=grid,
            in_specs=[pl.BlockSpec((tile_b, tile_l), lambda b, i, k: (b, k)),
                      pl.BlockSpec((tile_l, tile_rn), lambda b, i, k: (k, i)),
                      pl.BlockSpec((1, tile_rn), lambda b, i, k: (0, i))],
            out_specs=pl.BlockSpec((tile_b, tile_rn), lambda b, i, k: (b, i)),
            scratch_shapes=[pltpu.VMEM((tile_b, tile_rn), jnp.float32)]),
        compiler_params=pltpu.CompilerParams(
            dimension_semantics=("parallel", "parallel", "arbitrary"),
            vmem_limit_bytes=32 * 1024 * 1024),
        cost_estimate=pl.CostEstimate(
            flops=2 * b_pad * rn_pad * l_pad,
            transcendentals=0,
            bytes_accessed=int(x_p.size * itemsize
                               + rn_pad * l_pad * itemsize
                               + rn_pad * 4 + b_pad * rn_pad * 4)),
    )(x_p, params["w_efft"], params["bias"])

    y = y[:batch, :rn]
    return y.reshape(batch, reuse_times, *output_shape)


# ----------------------------------------------------------------------------
# Deterministic parameter / index construction (mirrors the torch __init__)
# ----------------------------------------------------------------------------
def get_connections_index(key, input_shape, neurons, focus, intensity=1.0):
    ndim = len(input_shape)
    flat_len = _prod(input_shape)
    k1, k2 = jax.random.split(key)

    centers_flat = jax.random.randint(k1, (neurons,), 0, flat_len)
    centers_multi = jnp.stack(
        jnp.unravel_index(centers_flat, input_shape), axis=1).astype(jnp.float32)
    centers_sorted = jnp.sort(centers_multi, axis=0)
    centers_rep = jnp.tile(centers_sorted, (1, focus))            # (N, F*ndim)

    sigma = jnp.sqrt(jnp.float32(focus)) / 2.0
    noise = intensity * sigma * jax.random.normal(k2, centers_rep.shape)
    conn = (centers_rep + noise).reshape(neurons, focus, ndim)
    max_v = jnp.asarray(input_shape, jnp.float32) - 1.0
    conn = jnp.round(jnp.clip(conn, 0.0, max_v)).astype(jnp.int32)

    strides = jnp.asarray(_row_major_strides(input_shape), jnp.int32)
    conn_flat = jnp.sum(conn * strides[None, None, :], axis=-1)   # (N, F)
    return conn_flat


def build_params(key, input_shape, output_shape, focus, reuse_times, intensity=1.0):
    neurons = _prod(output_shape)
    k_idx, k_w, k_b, k_perm = jax.random.split(key, 4)

    conn = get_connections_index(k_idx, input_shape, neurons, focus, intensity)
    idx_list = [conn]
    for _ in range(reuse_times - 1):
        k_perm, k_r = jax.random.split(k_perm)
        perm = jax.random.permutation(k_r, neurons)
        idx_list.append(conn[perm])
    conn_shuffle = jnp.stack(idx_list)                            # (R, N, F)

    weights = 0.01 * jax.random.normal(k_w, (neurons, focus), jnp.float32)
    bias = 0.01 * jax.random.normal(k_b, (neurons,), jnp.float32)
    return conn_shuffle, weights, bias


# ----------------------------------------------------------------------------
# Pure-JAX reference of the torch forward (gather / mul / sum / bias), f32.
# ----------------------------------------------------------------------------
def reference_forward(x, connections_index, weights, bias,
                      input_shape, output_shape, reuse_times):
    L = _prod(input_shape)
    neurons = _prod(output_shape)
    focus = weights.shape[1]
    batch = x.shape[0]
    x_flat = x.reshape(batch, L)
    flat_idx = connections_index.reshape(-1)
    x_sel = x_flat[:, flat_idx].reshape(batch, reuse_times, neurons, focus)
    y = (x_sel * weights[None, None]).sum(-1) + bias[None, None]
    return y.reshape(batch, reuse_times, *output_shape)


if __name__ == "__main__":
    input_shape = (4, 16, 16)     # L = 1024
    output_shape = (8, 4)         # neurons = 32
    focus = 8
    reuse_times = 2
    batch = 2

    key = jax.random.PRNGKey(0)
    k_params, k_x = jax.random.split(key)

    conn_idx, weights, bias = build_params(
        k_params, input_shape, output_shape, focus, reuse_times, intensity=1.0)

    x = jax.random.normal(k_x, (batch,) + input_shape, jnp.float32)

    # One-time, amortized W_effT / bias precompute (bf16 storage, f32 build).
    params = precompute_effective_params(
        conn_idx, weights, bias, input_shape, reuse_times,
        compute_dtype=jnp.bfloat16, tile_rn=128, tile_l=256)
    jax.block_until_ready(params["w_efft"])

    y = limited_attention_forward(
        x, params, input_shape, output_shape, reuse_times)
    y = jax.block_until_ready(y)

    y_ref = reference_forward(
        x, conn_idx, weights, bias, input_shape, output_shape, reuse_times)

    assert y.shape == (batch, reuse_times) + output_shape, y.shape
    max_err = float(jnp.abs(y - y_ref).max())
    # bf16 x / W_eff with f32 accumulation -> bf16-level tolerance.
    assert jnp.allclose(y, y_ref, atol=5e-3, rtol=5e-2), max_err

    print("KERNEL_OK")
</pallas_src>

<mosaic_0001>
module attributes {stable_mosaic.version = 11 : i64} {
  func.func @_build_wefft_kernel(%arg0: i32, %arg1: i32, %arg2: memref<8x128xi32, #tpu.memory_space<vmem>>, %arg3: memref<8x128xf32, #tpu.memory_space<vmem>>, %arg4: memref<256x128xbf16, #tpu.memory_space<vmem>>) attributes {dimension_semantics = [#tpu.dimension_semantics<parallel>, #tpu.dimension_semantics<parallel>], iteration_bounds = array<i64: 4, 1>, scalar_prefetch = 0 : i64, scratch_operands = 0 : i64, tpu.core_type = #tpu.core_type<tc>, window_params = [{transform_indices = @transform_0, window_bounds = array<i64: 8, 128>}, {transform_indices = @transform_1, window_bounds = array<i64: 8, 128>}, {transform_indices = @transform_2, window_bounds = array<i64: 256, 128>}]} {
    %c256_i32 = arith.constant 256 : i32
    %0 = arith.muli %arg0, %c256_i32 : i32
    %1 = tpu.iota {dimensions = array<i32: 0>} : vector<256x1xi32>
    %2 = vector.broadcast %0 : i32 to vector<256x1xi32>
    %3 = arith.addi %1, %2 : vector<256x1xi32>
    %cst = arith.constant 0.000000e+00 : f32
    %4 = vector.broadcast %cst : f32 to vector<256x128xf32>
    %c0 = arith.constant 0 : index
    %c0_0 = arith.constant 0 : index
    %5 = vector.load %arg2[%c0, %c0_0] : memref<8x128xi32, #tpu.memory_space<vmem>>, vector<1x128xi32>
    %c0_1 = arith.constant 0 : index
    %c0_2 = arith.constant 0 : index
    %6 = vector.load %arg3[%c0_1, %c0_2] : memref<8x128xf32, #tpu.memory_space<vmem>>, vector<1x128xf32>
    %7 = vector.broadcast %3 : vector<256x1xi32> to vector<256x128xi32>
    %8 = vector.broadcast %5 : vector<1x128xi32> to vector<256x128xi32>
    %9 = arith.cmpi eq, %7, %8 : vector<256x128xi32>
    %cst_3 = arith.constant 0.000000e+00 : f32
    %10 = vector.shape_cast %6 : vector<1x128xf32> to vector<1x128xf32>
    %11 = vector.broadcast %10 : vector<1x128xf32> to vector<256x128xf32>
    %12 = vector.broadcast %cst_3 : f32 to vector<256x128xf32>
    %13 = arith.select %9, %11, %12 : vector<256x128xi1>, vector<256x128xf32>
    %14 = arith.addf %4, %13 : vector<256x128xf32>
    %c1 = arith.constant 1 : index
    %c0_4 = arith.constant 0 : index
    %15 = vector.load %arg2[%c1, %c0_4] : memref<8x128xi32, #tpu.memory_space<vmem>>, vector<1x128xi32>
    %c1_5 = arith.constant 1 : index
    %c0_6 = arith.constant 0 : index
    %16 = vector.load %arg3[%c1_5, %c0_6] : memref<8x128xf32, #tpu.memory_space<vmem>>, vector<1x128xf32>
    %17 = vector.broadcast %3 : vector<256x1xi32> to vector<256x128xi32>
    %18 = vector.broadcast %15 : vector<1x128xi32> to vector<256x128xi32>
    %19 = arith.cmpi eq, %17, %18 : vector<256x128xi32>
    %cst_7 = arith.constant 0.000000e+00 : f32
    %20 = vector.shape_cast %16 : vector<1x128xf32> to vector<1x128xf32>
    %21 = vector.broadcast %20 : vector<1x128xf32> to vector<256x128xf32>
    %22 = vector.broadcast %cst_7 : f32 to vector<256x128xf32>
    %23 = arith.select %19, %21, %22 : vector<256x128xi1>, vector<256x128xf32>
    %24 = arith.addf %14, %23 : vector<256x128xf32>
    %c2 = arith.constant 2 : index
    %c0_8 = arith.constant 0 : index
    %25 = vector.load %arg2[%c2, %c0_8] : memref<8x128xi32, #tpu.memory_space<vmem>>, vector<1x128xi32>
    %c2_9 = arith.constant 2 : index
    %c0_10 = arith.constant 0 : index
    %26 = vector.load %arg3[%c2_9, %c0_10] : memref<8x128xf32, #tpu.memory_space<vmem>>, vector<1x128xf32>
    %27 = vector.broadcast %3 : vector<256x1xi32> to vector<256x128xi32>
    %28 = vector.broadcast %25 : vector<1x128xi32> to vector<256x128xi32>
    %29 = arith.cmpi eq, %27, %28 : vector<256x128xi32>
    %cst_11 = arith.constant 0.000000e+00 : f32
    %30 = vector.shape_cast %26 : vector<1x128xf32> to vector<1x128xf32>
    %31 = vector.broadcast %30 : vector<1x128xf32> to vector<256x128xf32>
    %32 = vector.broadcast %cst_11 : f32 to vector<256x128xf32>
    %33 = arith.select %29, %31, %32 : vector<256x128xi1>, vector<256x128xf32>
    %34 = arith.addf %24, %33 : vector<256x128xf32>
    %c3 = arith.constant 3 : index
    %c0_12 = arith.constant 0 : index
    %35 = vector.load %arg2[%c3, %c0_12] : memref<8x128xi32, #tpu.memory_space<vmem>>, vector<1x128xi32>
    %c3_13 = arith.constant 3 : index
    %c0_14 = arith.constant 0 : index
    %36 = vector.load %arg3[%c3_13, %c0_14] : memref<8x128xf32, #tpu.memory_space<vmem>>, vector<1x128xf32>
    %37 = vector.broadcast %3 : vector<256x1xi32> to vector<256x128xi32>
    %38 = vector.broadcast %35 : vector<1x128xi32> to vector<256x128xi32>
    %39 = arith.cmpi eq, %37, %38 : vector<256x128xi32>
    %cst_15 = arith.constant 0.000000e+00 : f32
    %40 = vector.shape_cast %36 : vector<1x128xf32> to vector<1x128xf32>
    %41 = vector.broadcast %40 : vector<1x128xf32> to vector<256x128xf32>
    %42 = vector.broadcast %cst_15 : f32 to vector<256x128xf32>
    %43 = arith.select %39, %41, %42 : vector<256x128xi1>, vector<256x128xf32>
    %44 = arith.addf %34, %43 : vector<256x128xf32>
    %c4 = arith.constant 4 : index
    %c0_16 = arith.constant 0 : index
    %45 = vector.load %arg2[%c4, %c0_16] : memref<8x128xi32, #tpu.memory_space<vmem>>, vector<1x128xi32>
    %c4_17 = arith.constant 4 : index
    %c0_18 = arith.constant 0 : index
    %46 = vector.load %arg3[%c4_17, %c0_18] : memref<8x128xf32, #tpu.memory_space<vmem>>, vector<1x128xf32>
    %47 = vector.broadcast %3 : vector<256x1xi32> to vector<256x128xi32>
    %48 = vector.broadcast %45 : vector<1x128xi32> to vector<256x128xi32>
    %49 = arith.cmpi eq, %47, %48 : vector<256x128xi32>
    %cst_19 = arith.constant 0.000000e+00 : f32
    %50 = vector.shape_cast %46 : vector<1x128xf32> to vector<1x128xf32>
    %51 = vector.broadcast %50 : vector<1x128xf32> to vector<256x128xf32>
    %52 = vector.broadcast %cst_19 : f32 to vector<256x128xf32>
    %53 = arith.select %49, %51, %52 : vector<256x128xi1>, vector<256x128xf32>
    %54 = arith.addf %44, %53 : vector<256x128xf32>
    %c5 = arith.constant 5 : index
    %c0_20 = arith.constant 0 : index
    %55 = vector.load %arg2[%c5, %c0_20] : memref<8x128xi32, #tpu.memory_space<vmem>>, vector<1x128xi32>
    %c5_21 = arith.constant 5 : index
    %c0_22 = arith.constant 0 : index
    %56 = vector.load %arg3[%c5_21, %c0_22] : memref<8x128xf32, #tpu.memory_space<vmem>>, vector<1x128xf32>
    %57 = vector.broadcast %3 : vector<256x1xi32> to vector<256x128xi32>
    %58 = vector.broadcast %55 : vector<1x128xi32> to vector<256x128xi32>
    %59 = arith.cmpi eq, %57, %58 : vector<256x128xi32>
    %cst_23 = arith.constant 0.000000e+00 : f32
    %60 = vector.shape_cast %56 : vector<1x128xf32> to vector<1x128xf32>
    %61 = vector.broadcast %60 : vector<1x128xf32> to vector<256x128xf32>
    %62 = vector.broadcast %cst_23 : f32 to vector<256x128xf32>
    %63 = arith.select %59, %61, %62 : vector<256x128xi1>, vector<256x128xf32>
    %64 = arith.addf %54, %63 : vector<256x128xf32>
    %c6 = arith.constant 6 : index
    %c0_24 = arith.constant 0 : index
    %65 = vector.load %arg2[%c6, %c0_24] : memref<8x128xi32, #tpu.memory_space<vmem>>, vector<1x128xi32>
    %c6_25 = arith.constant 6 : index
    %c0_26 = arith.constant 0 : index
    %66 = vector.load %arg3[%c6_25, %c0_26] : memref<8x128xf32, #tpu.memory_space<vmem>>, vector<1x128xf32>
    %67 = vector.broadcast %3 : vector<256x1xi32> to vector<256x128xi32>
    %68 = vector.broadcast %65 : vector<1x128xi32> to vector<256x128xi32>
    %69 = arith.cmpi eq, %67, %68 : vector<256x128xi32>
    %cst_27 = arith.constant 0.000000e+00 : f32
    %70 = vector.shape_cast %66 : vector<1x128xf32> to vector<1x128xf32>
    %71 = vector.broadcast %70 : vector<1x128xf32> to vector<256x128xf32>
    %72 = vector.broadcast %cst_27 : f32 to vector<256x128xf32>
    %73 = arith.select %69, %71, %72 : vector<256x128xi1>, vector<256x128xf32>
    %74 = arith.addf %64, %73 : vector<256x128xf32>
    %c7 = arith.constant 7 : index
    %c0_28 = arith.constant 0 : index
    %75 = vector.load %arg2[%c7, %c0_28] : memref<8x128xi32, #tpu.memory_space<vmem>>, vector<1x128xi32>
    %c7_29 = arith.constant 7 : index
    %c0_30 = arith.constant 0 : index
    %76 = vector.load %arg3[%c7_29, %c0_30] : memref<8x128xf32, #tpu.memory_space<vmem>>, vector<1x128xf32>
    %77 = vector.broadcast %3 : vector<256x1xi32> to vector<256x128xi32>
    %78 = vector.broadcast %75 : vector<1x128xi32> to vector<256x128xi32>
    %79 = arith.cmpi eq, %77, %78 : vector<256x128xi32>
    %cst_31 = arith.constant 0.000000e+00 : f32
    %80 = vector.shape_cast %76 : vector<1x128xf32> to vector<1x128xf32>
    %81 = vector.broadcast %80 : vector<1x128xf32> to vector<256x128xf32>
    %82 = vector.broadcast %cst_31 : f32 to vector<256x128xf32>
    %83 = arith.select %79, %81, %82 : vector<256x128xi1>, vector<256x128xf32>
    %84 = arith.addf %74, %83 : vector<256x128xf32>
    %85 = arith.truncf %84 : vector<256x128xf32> to vector<256x128xbf16>
    %c0_32 = arith.constant 0 : index
    %c0_33 = arith.constant 0 : index
    %86 = vector.load %arg4[%c0_32, %c0_33] : memref<256x128xbf16, #tpu.memory_space<vmem>>, vector<256x128xbf16>
    tpu.vector_store %arg4[%c0_32, %c0_33], %85 {strides = array<i32>} : memref<256x128xbf16, #tpu.memory_space<vmem>>, vector<256x128xbf16>,
    return
  }
  func.func @transform_0(%arg0: i32, %arg1: i32) -> (i32, i32) {
    %c0_i32 = arith.constant 0 : i32
    %c0_i32_0 = arith.constant 0 : i32
    return %c0_i32, %arg1 : i32, i32
  }
  func.func @transform_1(%arg0: i32, %arg1: i32) -> (i32, i32) {
    %c0_i32 = arith.constant 0 : i32
    %c0_i32_0 = arith.constant 0 : i32
    return %c0_i32, %arg1 : i32, i32
  }
  func.func @transform_2(%arg0: i32, %arg1: i32) -> (i32, i32) {
    %c0_i32 = arith.constant 0 : i32
    return %arg0, %arg1 : i32, i32
  }
}

</mosaic_0001>

<llo_original>
// kernel: tpu_custom_call.1
$region0: #{tpu_custom_call.1}
  #allocation0 [shape = 'u32[]', space=smem, size = 0x4, offset = 0x4, fixed_abs, tag = 'smem constant byte address 0x4 - core index']
  #allocation1 [shape = 'u32[144,128]{1,0:T(1,128)}', space=vmem, size = 0x12000, scoped, tag = 'internal scratch']
  %s0 = inlined_call_operand.hbm [shape: s32[8,128], index: 0, kind: input, shape index: {}]
  %s1 = inlined_call_operand.hbm [shape: f32[8,128], index: 1, kind: input, shape index: {}]
  %s2 = inlined_call_operand.hbm [shape: bf16[1024,128], index: 2, kind: output, shape index: {}]
  %s3 = sld [smem:[#allocation0]]
  $region49: #{tpu_custom_call.1} parent=0
    _
  %s5 = ssub.s32 1, %s3
  %s6 = scalar_select 0, %s5, %s3
  $region1: #{tpu_custom_call.1} parent=0
    #allocation2 [shape = 'u8[4096]{0}', space=vmem, size = 0x1000, scoped, tag = 'input window, operand 0, single buffered']
    #allocation3 [shape = 's32[2]{0}', space=sflag, size = 0x8, scoped, tag = 'scoped memory for tpu_custom_call.1']
    #allocation4 [shape = 's32[2]{0}', space=sflag, size = 0x8, scoped, tag = 'scoped memory for tpu_custom_call.1']
    #allocation5 [shape = 'u8[4096]{0}', space=vmem, size = 0x1000, scoped, tag = 'input window, operand 1, single buffered']
    #allocation6 [shape = 's32[1]{0}', space=sflag, size = 0x4, scoped, tag = 'scoped memory for tpu_custom_call.1']
    #allocation7 [shape = 'u8[131072]{0}', space=vmem, size = 0x20000, scoped, tag = 'output window, operand 0']
    %7 = vsyncpa [#allocation3], 0
    %8 = vsyncpa [#allocation6], 0
    %9 = vsyncpa [#allocation4], 0
    %s10 = scalar_lea.sflag [#allocation4], 1
    %11 = vsyncpa %s10, 0
    loop: start=0, step=1, limit=6
    $region2: #{tpu_custom_call.1} parent=1 // loop_pre_header
      _
    $region3: #{tpu_custom_call.1} parent=1 // loop_header
      %s13 = sphi 0, %s17
      %p14 = scmp.ge.s32.totalorder %s13, 6
      %s20 = sphi 0, %s32
      %s21 = sphi 0, %s28
      %s22 = sphi 0, %s20
      %s23 = sphi 0, %s21
      %s24 = sphi 0, %s22
      %s25 = sphi 0, %s23
      %s35 = sphi 0, %s37
      %s38 = sphi 0, %s35
      %s39 = sphi 0, %s38
      %s55 = sphi 0, %s39
      %s61 = sphi 0, %s63
      %s64 = sphi 0, %s61
      %s65 = sphi 0, %s64
      %s81 = sphi 0, %s65
      %s89 = sphi 0, %s91
      %s92 = sphi 0, %s89
      %s93 = sphi 0, %s92
      %s109 = sphi 0, %s93
    $region4: #{tpu_custom_call.1} parent=1 // loop_header_branch
      %16 = sbr.rel (%p14) target = $region8
    $region5: #{tpu_custom_call.1} parent=1 // loop_body
      %s18 = ssub.s32 %s13, 1
      %s19 = ssub.s32 %s13, 2
      %s26 = sadd.s32 1, %s21
      %p27 = scmp.ge.s32.totalorder %s26, 1
      %s28 = scalar_select %p27, 0, %s26
      %s29 = sadd.s32 1, %s20
      %s30 = scalar_select %p27, %s29, %s20
      %p31 = scmp.ge.s32.totalorder %s30, 4
      %s32 = scalar_select %p31, 0, %s30
      %s33 = ssub.s32 %s21, %s28
      %p34 = scmp.eq.s32.totalorder %s33, 0
      %s36 = sadd.s32 %s35, 1
      %s37 = scalar_select %p34, %s35, %s36
      %p40 = pneg %p34
      %p41 = scmp.eq.s32.totalorder %s13, 3
      %p42 = por %p40, %p41
      %p43 = scmp.ne.s32.totalorder %s35, %s38
      %p44 = scmp.eq.s32.totalorder %s13, 0
      %p45 = por %p43, %p44
      %p46 = scmp.ne.s32.totalorder %s35, %s38
      %p47 = scmp.eq.s32.totalorder %s18, 3
      %p48 = por %p46, %p47
      %p49 = scmp.ne.s32.totalorder %s38, %s39
      %p50 = scmp.eq.s32.totalorder %s18, 0
      %p51 = por %p49, %p50
      %p52 = scmp.ne.s32.totalorder %s38, %s39
      %p53 = scmp.eq.s32.totalorder %s19, 3
      %p54 = por %p52, %p53
      %p56 = scmp.ne.s32.totalorder %s39, %s55
      %p57 = scmp.eq.s32.totalorder %s19, 0
      %p58 = por %p56, %p57
      %s59 = ssub.s32 %s21, %s28
      %p60 = scmp.eq.s32.totalorder %s59, 0
      %s62 = sadd.s32 %s61, 1
      %s63 = scalar_select %p60, %s61, %s62
      %p66 = pneg %p60
      %p67 = scmp.eq.s32.totalorder %s13, 3
      %p68 = por %p66, %p67
      %p69 = scmp.ne.s32.totalorder %s61, %s64
      %p70 = scmp.eq.s32.totalorder %s13, 0
      %p71 = por %p69, %p70
      %p72 = scmp.ne.s32.totalorder %s61, %s64
      %p73 = scmp.eq.s32.totalorder %s18, 3
      %p74 = por %p72, %p73
      %p75 = scmp.ne.s32.totalorder %s64, %s65
      %p76 = scmp.eq.s32.totalorder %s18, 0
      %p77 = por %p75, %p76
      %p78 = scmp.ne.s32.totalorder %s64, %s65
      %p79 = scmp.eq.s32.totalorder %s19, 3
      %p80 = por %p78, %p79
      %p82 = scmp.ne.s32.totalorder %s65, %s81
      %p83 = scmp.eq.s32.totalorder %s19, 0
      %p84 = por %p82, %p83
      %s85 = ssub.s32 %s20, %s32
      %s86 = ssub.s32 %s21, %s28
      %s87 = sor.u32 %s85, %s86
      %p88 = scmp.eq.s32.totalorder %s87, 0
      %s90 = sadd.s32 %s89, 1
      %s91 = scalar_select %p88, %s89, %s90
      %p94 = pneg %p88
      %p95 = scmp.eq.s32.totalorder %s13, 3
      %p96 = por %p94, %p95
      %p97 = scmp.ne.s32.totalorder %s89, %s92
      %p98 = scmp.eq.s32.totalorder %s13, 0
      %p99 = por %p97, %p98
      %p100 = scmp.ne.s32.totalorder %s89, %s92
      %p101 = scmp.eq.s32.totalorder %s18, 3
      %p102 = por %p100, %p101
      %p103 = scmp.ne.s32.totalorder %s92, %s93
      %p104 = scmp.eq.s32.totalorder %s18, 0
      %p105 = por %p103, %p104
      %p106 = scmp.ne.s32.totalorder %s92, %s93
      %p107 = scmp.eq.s32.totalorder %s19, 3
      %p108 = por %p106, %p107
      %p110 = scmp.ne.s32.totalorder %s93, %s109
      %p111 = scmp.eq.s32.totalorder %s19, 0
      %p112 = por %p110, %p111
      %p113 = scmp.le.s32.totalorder 1, %s13
      %p114 = scmp.lt.s32.totalorder %s13, 5
      %p115 = pnand %p113, %p114
      %p116 = pneg %p115
      // Predicated region
      $region9: #{tpu_custom_call.1} parent=5 // pred_check
        _
      $region10: #{tpu_custom_call.1} parent=5 // pred_check_branch
        %118 = sbr.rel (%p115) target = $region12
      $region11: #{tpu_custom_call.1} parent=5 // pred_region
        %s119 = ssub.s32 %s13, 1
        // Predicated region
        $region13: #{tpu_custom_call.1} parent=11 // pred_check
          %p120 = pneg %p51
        $region14: #{tpu_custom_call.1} parent=11 // pred_check_branch
          %122 = sbr.rel (%p120) target = $region16
        $region15: #{tpu_custom_call.1} parent=11 // pred_region
          %s124 = ssub.s32 128, 128
          %125 = vsyncadd [#allocation3], %s124
          %s126 = smul.addr %s23, 128
          %s127 = scalar_lea.hbm %s0, %s126
          %s129 = sshll.u32 [#allocation2], 4
          %s130 = int_to_ptr.vmem [resolvable:$true] %s129
          %132 = dma.hbm_to_vmem [thread:$0]  %s127, 128, %s130, [#allocation3]
        $region16: #{tpu_custom_call.1} parent=11 // pred_fallthru
          _
        // Predicated region
        $region17: #{tpu_custom_call.1} parent=11 // pred_check
          %p133 = pneg %p77
        $region18: #{tpu_custom_call.1} parent=11 // pred_check_branch
          %135 = sbr.rel (%p133) target = $region20
        $region19: #{tpu_custom_call.1} parent=11 // pred_region
          %s137 = ssub.s32 128, 128
          %138 = vsyncadd [#allocation6], %s137
          %s139 = smul.addr %s23, 128
          %s140 = scalar_lea.hbm %s1, %s139
          %s142 = sshll.u32 [#allocation5], 4
          %s143 = int_to_ptr.vmem [resolvable:$true] %s142
          %145 = dma.hbm_to_vmem [thread:$0]  %s140, 128, %s143, [#allocation6]
        $region20: #{tpu_custom_call.1} parent=11 // pred_fallthru
          _
      $region12: #{tpu_custom_call.1} parent=5 // pred_fallthru
        _
      %p146 = scmp.lt.s32.totalorder %s13, 4
      // Predicated region
      $region21: #{tpu_custom_call.1} parent=5 // pred_check
        %p147 = pneg %p146
      $region22: #{tpu_custom_call.1} parent=5 // pred_check_branch
        %149 = sbr.rel (%p147) target = $region24
      $region23: #{tpu_custom_call.1} parent=5 // pred_region
        _
      $region24: #{tpu_custom_call.1} parent=5 // pred_fallthru
        _
      %p150 = scmp.le.s32.totalorder 1, %s13
      %p151 = scmp.lt.s32.totalorder %s13, 5
      %p152 = pnand %p150, %p151
      %p153 = pneg %p152
      // Predicated region
      $region25: #{tpu_custom_call.1} parent=5 // pred_check
        _
      $region26: #{tpu_custom_call.1} parent=5 // pred_check_branch
        %155 = sbr.rel (%p152) target = $region28
      $region27: #{tpu_custom_call.1} parent=5 // pred_region
        %s156 = ssub.s32 %s13, 1
        // Predicated region
        $region29: #{tpu_custom_call.1} parent=27 // pred_check
          %p157 = pneg %p51
        $region30: #{tpu_custom_call.1} parent=27 // pred_check_branch
          %159 = sbr.rel (%p157) target = $region32
        $region31: #{tpu_custom_call.1} parent=27 // pred_region
          %160 = dma.done [#allocation3], 128
        $region32: #{tpu_custom_call.1} parent=27 // pred_fallthru
          _
        // Predicated region
        $region33: #{tpu_custom_call.1} parent=27 // pred_check
          %p161 = pneg %p77
        $region34: #{tpu_custom_call.1} parent=27 // pred_check_branch
          %163 = sbr.rel (%p161) target = $region36
        $region35: #{tpu_custom_call.1} parent=27 // pred_region
          %164 = dma.done [#allocation6], 128
        $region36: #{tpu_custom_call.1} parent=27 // pred_fallthru
          _
        %p165 = pneg %p51
        %p166 = pneg %p48
        %p167 = pneg %p77
        %p168 = pneg %p74
        %p169 = pneg %p105
        %p170 = pneg %p102
        %s171 = sand.u32 %s92, 1
        %s172 = scalar_lea.sflag [#allocation4], %s171
        %s173 = sand.u32 %s92, 1
        %s174 = smul.addr %s173, 128
        %s175 = scalar_lea.vmem [#allocation7], %s174
        %s176 = smul.u32 32, %s22
        %s177 = smul.u32 %s22, 256
        %v178 = vlaneseq
        %v179 = vshrl.u32 %v178, 7
        %v180 = vadd.s32 %v179, 8
        %v181 = vadd.s32 %v179, 16
        %v182 = vadd.s32 %v179, 24
        %v183 = vadd.s32 %v179, 32
        %v184 = vadd.s32 %v179, 40
        %v185 = vadd.s32 %v179, 48
        %v186 = vadd.s32 %v179, 56
        %v187 = vadd.s32 %v179, 64
        %v188 = vadd.s32 %v179, 72
        %v189 = vadd.s32 %v179, 80
        %v190 = vadd.s32 %v179, 88
        %v191 = vadd.s32 %v179, 96
        %v192 = vadd.s32 %v179, 104
        %v193 = vadd.s32 %v179, 112
        %v194 = vadd.s32 %v179, 120
        %v195 = vadd.s32 %v179, 128
        %v196 = vadd.s32 %v179, 136
        %v197 = vadd.s32 %v179, 144
        %v198 = vadd.s32 %v179, 152
        %v199 = vadd.s32 %v179, 160
        %v200 = vadd.s32 %v179, 168
        %v201 = vadd.s32 %v179, 176
        %v202 = vadd.s32 %v179, 184
        %v203 = vadd.s32 %v179, 192
        %v204 = vadd.s32 %v179, 200
        %v205 = vadd.s32 %v179, 208
        %v206 = vadd.s32 %v179, 216
        %v207 = vadd.s32 %v179, 224
        %v208 = vadd.s32 %v179, 232
        %v209 = vadd.s32 %v179, 240
        %v210 = vadd.s32 %v179, 248
        %v211 = vstv %s177
        %v212 = vadd.s32 %v179, %v211
        %v213 = vadd.s32 %v180, %v211
        %v214 = vadd.s32 %v181, %v211
        %v215 = vadd.s32 %v182, %v211
        %v216 = vadd.s32 %v183, %v211
        %v217 = vadd.s32 %v184, %v211
        %v218 = vadd.s32 %v185, %v211
        %v219 = vadd.s32 %v186, %v211
        %v220 = vadd.s32 %v187, %v211
        %v221 = vadd.s32 %v188, %v211
        %v222 = vadd.s32 %v189, %v211
        %v223 = vadd.s32 %v190, %v211
        %v224 = vadd.s32 %v191, %v211
        %v225 = vadd.s32 %v192, %v211
        %v226 = vadd.s32 %v193, %v211
        %v227 = vadd.s32 %v194, %v211
        %v228 = vadd.s32 %v195, %v211
        %v229 = vadd.s32 %v196, %v211
        %v230 = vadd.s32 %v197, %v211
        %v231 = vadd.s32 %v198, %v211
        %v232 = vadd.s32 %v199, %v211
        %v233 = vadd.s32 %v200, %v211
        %v234 = vadd.s32 %v201, %v211
        %v235 = vadd.s32 %v202, %v211
        %v236 = vadd.s32 %v203, %v211
        %v237 = vadd.s32 %v204, %v211
        %v238 = vadd.s32 %v205, %v211
        %v239 = vadd.s32 %v206, %v211
        %v240 = vadd.s32 %v207, %v211
        %v241 = vadd.s32 %v208, %v211
        %v242 = vadd.s32 %v209, %v211
        %v243 = vadd.s32 %v210, %v211
        %v244 = vld [vmem:[#allocation2] sm:$0x1]
        %v245 = vld [vmem:[#allocation5] sm:$0x1]
        %v246 = vlaneseq
        %v247 = vshrl.u32 %v246, 7
        %v248 = vsub.s32 0, %v247
        %v249 = vrot.slane %v244, %v248
        %vm250 = vcmp.eq.s32.totalorder %v212, %v249
        %vm251 = vcmp.eq.s32.totalorder %v213, %v249
        %vm252 = vcmp.eq.s32.totalorder %v214, %v249
        %vm253 = vcmp.eq.s32.totalorder %v215, %v249
        %vm254 = vcmp.eq.s32.totalorder %v216, %v249
        %vm255 = vcmp.eq.s32.totalorder %v217, %v249
        %vm256 = vcmp.eq.s32.totalorder %v218, %v249
        %vm257 = vcmp.eq.s32.totalorder %v219, %v249
        %vm258 = vcmp.eq.s32.totalorder %v220, %v249
        %vm259 = vcmp.eq.s32.totalorder %v221, %v249
        %vm260 = vcmp.eq.s32.totalorder %v222, %v249
        %vm261 = vcmp.eq.s32.totalorder %v223, %v249
        %vm262 = vcmp.eq.s32.totalorder %v224, %v249
        %vm263 = vcmp.eq.s32.totalorder %v225, %v249
        %vm264 = vcmp.eq.s32.totalorder %v226, %v249
        %vm265 = vcmp.eq.s32.totalorder %v227, %v249
        %vm266 = vcmp.eq.s32.totalorder %v228, %v249
        %vm267 = vcmp.eq.s32.totalorder %v229, %v249
        %vm268 = vcmp.eq.s32.totalorder %v230, %v249
        %vm269 = vcmp.eq.s32.totalorder %v231, %v249
        %vm270 = vcmp.eq.s32.totalorder %v232, %v249
        %vm271 = vcmp.eq.s32.totalorder %v233, %v249
        %vm272 = vcmp.eq.s32.totalorder %v234, %v249
        %vm273 = vcmp.eq.s32.totalorder %v235, %v249
        %vm274 = vcmp.eq.s32.totalorder %v236, %v249
        %vm275 = vcmp.eq.s32.totalorder %v237, %v249
        %vm276 = vcmp.eq.s32.totalorder %v238, %v249
        %vm277 = vcmp.eq.s32.totalorder %v239, %v249
        %vm278 = vcmp.eq.s32.totalorder %v240, %v249
        %vm279 = vcmp.eq.s32.totalorder %v241, %v249
        %vm280 = vcmp.eq.s32.totalorder %v242, %v249
        %vm281 = vcmp.eq.s32.totalorder %v243, %v249
        %v282 = vlaneseq
        %v283 = vshrl.u32 %v282, 7
        %v284 = vsub.s32 0, %v283
        %v285 = vrot.slane %v245, %v284
        %v286 = vsel %vm250, %v285, 0.0
        %v287 = vsel %vm251, %v285, 0.0
        %v288 = vsel %vm252, %v285, 0.0
        %v289 = vsel %vm253, %v285, 0.0
        %v290 = vsel %vm254, %v285, 0.0
        %v291 = vsel %vm255, %v285, 0.0
        %v292 = vsel %vm256, %v285, 0.0
        %v293 = vsel %vm257, %v285, 0.0
        %v294 = vsel %vm258, %v285, 0.0
        %v295 = vsel %vm259, %v285, 0.0
        %v296 = vsel %vm260, %v285, 0.0
        %v297 = vsel %vm261, %v285, 0.0
        %v298 = vsel %vm262, %v285, 0.0
        %v299 = vsel %vm263, %v285, 0.0
        %v300 = vsel %vm264, %v285, 0.0
        %v301 = vsel %vm265, %v285, 0.0
        %v302 = vsel %vm266, %v285, 0.0
        %v303 = vsel %vm267, %v285, 0.0
        %v304 = vsel %vm268, %v285, 0.0
        %v305 = vsel %vm269, %v285, 0.0
        %v306 = vsel %vm270, %v285, 0.0
        %v307 = vsel %vm271, %v285, 0.0
        %v308 = vsel %vm272, %v285, 0.0
        %v309 = vsel %vm273, %v285, 0.0
        %v310 = vsel %vm274, %v285, 0.0
        %v311 = vsel %vm275, %v285, 0.0
        %v312 = vsel %vm276, %v285, 0.0
        %v313 = vsel %vm277, %v285, 0.0
        %v314 = vsel %vm278, %v285, 0.0
        %v315 = vsel %vm279, %v285, 0.0
        %v316 = vsel %vm280, %v285, 0.0
        %v317 = vsel %vm281, %v285, 0.0
        %v318 = vadd.f32 %v286, 0.0
        %v319 = vadd.f32 %v287, 0.0
        %v320 = vadd.f32 %v288, 0.0
        %v321 = vadd.f32 %v289, 0.0
        %v322 = vadd.f32 %v290, 0.0
        %v323 = vadd.f32 %v291, 0.0
        %v324 = vadd.f32 %v292, 0.0
        %v325 = vadd.f32 %v293, 0.0
        %v326 = vadd.f32 %v294, 0.0
        %v327 = vadd.f32 %v295, 0.0
        %v328 = vadd.f32 %v296, 0.0
        %v329 = vadd.f32 %v297, 0.0
        %v330 = vadd.f32 %v298, 0.0
        %v331 = vadd.f32 %v299, 0.0
        %v332 = vadd.f32 %v300, 0.0
        %v333 = vadd.f32 %v301, 0.0
        %v334 = vadd.f32 %v302, 0.0
        %v335 = vadd.f32 %v303, 0.0
        %v336 = vadd.f32 %v304, 0.0
        %v337 = vadd.f32 %v305, 0.0
        %v338 = vadd.f32 %v306, 0.0
        %v339 = vadd.f32 %v307, 0.0
        %v340 = vadd.f32 %v308, 0.0
        %v341 = vadd.f32 %v309, 0.0
        %v342 = vadd.f32 %v310, 0.0
        %v343 = vadd.f32 %v311, 0.0
        %v344 = vadd.f32 %v312, 0.0
        %v345 = vadd.f32 %v313, 0.0
        %v346 = vadd.f32 %v314, 0.0
        %v347 = vadd.f32 %v315, 0.0
        %v348 = vadd.f32 %v316, 0.0
        %v349 = vadd.f32 %v317, 0.0
        %v350 = vld [vmem:[#allocation2 + $0x1] sm:$0x1]
        %v351 = vld [vmem:[#allocation5 + $0x1] sm:$0x1]
        %v352 = vlaneseq
        %v353 = vshrl.u32 %v352, 7
        %v354 = vsub.s32 0, %v353
        %v355 = vrot.slane %v350, %v354
        %vm356 = vcmp.eq.s32.totalorder %v212, %v355
        %vm357 = vcmp.eq.s32.totalorder %v213, %v355
        %vm358 = vcmp.eq.s32.totalorder %v214, %v355
        %vm359 = vcmp.eq.s32.totalorder %v215, %v355
        %vm360 = vcmp.eq.s32.totalorder %v216, %v355
        %vm361 = vcmp.eq.s32.totalorder %v217, %v355
        %vm362 = vcmp.eq.s32.totalorder %v218, %v355
        %vm363 = vcmp.eq.s32.totalorder %v219, %v355
        %vm364 = vcmp.eq.s32.totalorder %v220, %v355
        %vm365 = vcmp.eq.s32.totalorder %v221, %v355
        %vm366 = vcmp.eq.s32.totalorder %v222, %v355
        %vm367 = vcmp.eq.s32.totalorder %v223, %v355
        %vm368 = vcmp.eq.s32.totalorder %v224, %v355
        %vm369 = vcmp.eq.s32.totalorder %v225, %v355
        %vm370 = vcmp.eq.s32.totalorder %v226, %v355
        %vm371 = vcmp.eq.s32.totalorder %v227, %v355
        %vm372 = vcmp.eq.s32.totalorder %v228, %v355
        %vm373 = vcmp.eq.s32.totalorder %v229, %v355
        %vm374 = vcmp.eq.s32.totalorder %v230, %v355
        %vm375 = vcmp.eq.s32.totalorder %v231, %v355
        %vm376 = vcmp.eq.s32.totalorder %v232, %v355
        %vm377 = vcmp.eq.s32.totalorder %v233, %v355
        %vm378 = vcmp.eq.s32.totalorder %v234, %v355
        %vm379 = vcmp.eq.s32.totalorder %v235, %v355
        %vm380 = vcmp.eq.s32.totalorder %v236, %v355
        %vm381 = vcmp.eq.s32.totalorder %v237, %v355
        %vm382 = vcmp.eq.s32.totalorder %v238, %v355
        %vm383 = vcmp.eq.s32.totalorder %v239, %v355
        %vm384 = vcmp.eq.s32.totalorder %v240, %v355
        %vm385 = vcmp.eq.s32.totalorder %v241, %v355
        %vm386 = vcmp.eq.s32.totalorder %v242, %v355
        %vm387 = vcmp.eq.s32.totalorder %v243, %v355
        %v388 = vlaneseq
        %v389 = vshrl.u32 %v388, 7
        %v390 = vsub.s32 0, %v389
        %v391 = vrot.slane %v351, %v390
        %v392 = vsel %vm356, %v391, 0.0
        %v393 = vsel %vm357, %v391, 0.0
        %v394 = vsel %vm358, %v391, 0.0
        %v395 = vsel %vm359, %v391, 0.0
        %v396 = vsel %vm360, %v391, 0.0
        %v397 = vsel %vm361, %v391, 0.0
        %v398 = vsel %vm362, %v391, 0.0
        %v399 = vsel %vm363, %v391, 0.0
        %v400 = vsel %vm364, %v391, 0.0
        %v401 = vsel %vm365, %v391, 0.0
        %v402 = vsel %vm366, %v391, 0.0
        %v403 = vsel %vm367, %v391, 0.0
        %v404 = vsel %vm368, %v391, 0.0
        %v405 = vsel %vm369, %v391, 0.0
        %v406 = vsel %vm370, %v391, 0.0
        %v407 = vsel %vm371, %v391, 0.0
        %v408 = vsel %vm372, %v391, 0.0
        %v409 = vsel %vm373, %v391, 0.0
        %v410 = vsel %vm374, %v391, 0.0
        %v411 = vsel %vm375, %v391, 0.0
        %v412 = vsel %vm376, %v391, 0.0
        %v413 = vsel %vm377, %v391, 0.0
        %v414 = vsel %vm378, %v391, 0.0
        %v415 = vsel %vm379, %v391, 0.0
        %v416 = vsel %vm380, %v391, 0.0
        %v417 = vsel %vm381, %v391, 0.0
        %v418 = vsel %vm382, %v391, 0.0
        %v419 = vsel %vm383, %v391, 0.0
        %v420 = vsel %vm384, %v391, 0.0
        %v421 = vsel %vm385, %v391, 0.0
        %v422 = vsel %vm386, %v391, 0.0
        %v423 = vsel %vm387, %v391, 0.0
        %v424 = vadd.f32 %v318, %v392
        %v425 = vadd.f32 %v319, %v393
        %v426 = vadd.f32 %v320, %v394
        %v427 = vadd.f32 %v321, %v395
        %v428 = vadd.f32 %v322, %v396
        %v429 = vadd.f32 %v323, %v397
        %v430 = vadd.f32 %v324, %v398
        %v431 = vadd.f32 %v325, %v399
        %v432 = vadd.f32 %v326, %v400
        %v433 = vadd.f32 %v327, %v401
        %v434 = vadd.f32 %v328, %v402
        %v435 = vadd.f32 %v329, %v403
        %v436 = vadd.f32 %v330, %v404
        %v437 = vadd.f32 %v331, %v405
        %v438 = vadd.f32 %v332, %v406
        %v439 = vadd.f32 %v333, %v407
        %v440 = vadd.f32 %v334, %v408
        %v441 = vadd.f32 %v335, %v409
        %v442 = vadd.f32 %v336, %v410
        %v443 = vadd.f32 %v337, %v411
        %v444 = vadd.f32 %v338, %v412
        %v445 = vadd.f32 %v339, %v413
        %v446 = vadd.f32 %v340, %v414
        %v447 = vadd.f32 %v341, %v415
        %v448 = vadd.f32 %v342, %v416
        %v449 = vadd.f32 %v343, %v417
        %v450 = vadd.f32 %v344, %v418
        %v451 = vadd.f32 %v345, %v419
        %v452 = vadd.f32 %v346, %v420
        %v453 = vadd.f32 %v347, %v421
        %v454 = vadd.f32 %v348, %v422
        %v455 = vadd.f32 %v349, %v423
        %v456 = vld [vmem:[#allocation2 + $0x2] sm:$0x1]
        %v457 = vld [vmem:[#allocation5 + $0x2] sm:$0x1]
        %v458 = vlaneseq
        %v459 = vshrl.u32 %v458, 7
        %v460 = vsub.s32 0, %v459
        %v461 = vrot.slane %v456, %v460
        %vm462 = vcmp.eq.s32.totalorder %v212, %v461
        %vm463 = vcmp.eq.s32.totalorder %v213, %v461
        %vm464 = vcmp.eq.s32.totalorder %v214, %v461
        %vm465 = vcmp.eq.s32.totalorder %v215, %v461
        %vm466 = vcmp.eq.s32.totalorder %v216, %v461
        %vm467 = vcmp.eq.s32.totalorder %v217, %v461
        %vm468 = vcmp.eq.s32.totalorder %v218, %v461
        %vm469 = vcmp.eq.s32.totalorder %v219, %v461
        %vm470 = vcmp.eq.s32.totalorder %v220, %v461
        %vm471 = vcmp.eq.s32.totalorder %v221, %v461
        %vm472 = vcmp.eq.s32.totalorder %v222, %v461
        %vm473 = vcmp.eq.s32.totalorder %v223, %v461
        %vm474 = vcmp.eq.s32.totalorder %v224, %v461
        %vm475 = vcmp.eq.s32.totalorder %v225, %v461
        %vm476 = vcmp.eq.s32.totalorder %v226, %v461
        %vm477 = vcmp.eq.s32.totalorder %v227, %v461
        %vm478 = vcmp.eq.s32.totalorder %v228, %v461
        %vm479 = vcmp.eq.s32.totalorder %v229, %v461
        %vm480 = vcmp.eq.s32.totalorder %v230, %v461
        %vm481 = vcmp.eq.s32.totalorder %v231, %v461
        %vm482 = vcmp.eq.s32.totalorder %v232, %v461
        %vm483 = vcmp.eq.s32.totalorder %v233, %v461
        %vm484 = vcmp.eq.s32.totalorder %v234, %v461
        %vm485 = vcmp.eq.s32.totalorder %v235, %v461
        %vm486 = vcmp.eq.s32.totalorder %v236, %v461
        %vm487 = vcmp.eq.s32.totalorder %v237, %v461
        %vm488 = vcmp.eq.s32.totalorder %v238, %v461
        %vm489 = vcmp.eq.s32.totalorder %v239, %v461
        %vm490 = vcmp.eq.s32.totalorder %v240, %v461
        %vm491 = vcmp.eq.s32.totalorder %v241, %v461
        %vm492 = vcmp.eq.s32.totalorder %v242, %v461
        %vm493 = vcmp.eq.s32.totalorder %v243, %v461
        %v494 = vlaneseq
        %v495 = vshrl.u32 %v494, 7
        %v496 = vsub.s32 0, %v495
        %v497 = vrot.slane %v457, %v496
        %v498 = vsel %vm462, %v497, 0.0
        %v499 = vsel %vm463, %v497, 0.0
        %v500 = vsel %vm464, %v497, 0.0
        %v501 = vsel %vm465, %v497, 0.0
        %v502 = vsel %vm466, %v497, 0.0
        %v503 = vsel %vm467, %v497, 0.0
        %v504 = vsel %vm468, %v497, 0.0
        %v505 = vsel %vm469, %v497, 0.0
        %v506 = vsel %vm470, %v497, 0.0
        %v507 = vsel %vm471, %v497, 0.0
        %v508 = vsel %vm472, %v497, 0.0
        %v509 = vsel %vm473, %v497, 0.0
        %v510 = vsel %vm474, %v497, 0.0
        %v511 = vsel %vm475, %v497, 0.0
        %v512 = vsel %vm476, %v497, 0.0
        %v513 = vsel %vm477, %v497, 0.0
        %v514 = vsel %vm478, %v497, 0.0
        %v515 = vsel %vm479, %v497, 0.0
        %v516 = vsel %vm480, %v497, 0.0
        %v517 = vsel %vm481, %v497, 0.0
        %v518 = vsel %vm482, %v497, 0.0
        %v519 = vsel %vm483, %v497, 0.0
        %v520 = vsel %vm484, %v497, 0.0
        %v521 = vsel %vm485, %v497, 0.0
        %v522 = vsel %vm486, %v497, 0.0
        %v523 = vsel %vm487, %v497, 0.0
        %v524 = vsel %vm488, %v497, 0.0
        %v525 = vsel %vm489, %v497, 0.0
        %v526 = vsel %vm490, %v497, 0.0
        %v527 = vsel %vm491, %v497, 0.0
        %v528 = vsel %vm492, %v497, 0.0
        %v529 = vsel %vm493, %v497, 0.0
        %v530 = vadd.f32 %v424, %v498
        %v531 = vadd.f32 %v425, %v499
        %v532 = vadd.f32 %v426, %v500
        %v533 = vadd.f32 %v427, %v501
        %v534 = vadd.f32 %v428, %v502
        %v535 = vadd.f32 %v429, %v503
        %v536 = vadd.f32 %v430, %v504
        %v537 = vadd.f32 %v431, %v505
        %v538 = vadd.f32 %v432, %v506
        %v539 = vadd.f32 %v433, %v507
        %v540 = vadd.f32 %v434, %v508
        %v541 = vadd.f32 %v435, %v509
        %v542 = vadd.f32 %v436, %v510
        %v543 = vadd.f32 %v437, %v511
        %v544 = vadd.f32 %v438, %v512
        %v545 = vadd.f32 %v439, %v513
        %v546 = vadd.f32 %v440, %v514
        %v547 = vadd.f32 %v441, %v515
        %v548 = vadd.f32 %v442, %v516
        %v549 = vadd.f32 %v443, %v517
        %v550 = vadd.f32 %v444, %v518
        %v551 = vadd.f32 %v445, %v519
        %v552 = vadd.f32 %v446, %v520
        %v553 = vadd.f32 %v447, %v521
        %v554 = vadd.f32 %v448, %v522
        %v555 = vadd.f32 %v449, %v523
        %v556 = vadd.f32 %v450, %v524
        %v557 = vadd.f32 %v451, %v525
        %v558 = vadd.f32 %v452, %v526
        %v559 = vadd.f32 %v453, %v527
        %v560 = vadd.f32 %v454, %v528
        %v561 = vadd.f32 %v455, %v529
        %v562 = vld [vmem:[#allocation2 + $0x3] sm:$0x1]
        %v563 = vld [vmem:[#allocation5 + $0x3] sm:$0x1]
        %v564 = vlaneseq
        %v565 = vshrl.u32 %v564, 7
        %v566 = vsub.s32 0, %v565
        %v567 = vrot.slane %v562, %v566
        %vm568 = vcmp.eq.s32.totalorder %v212, %v567
        %vm569 = vcmp.eq.s32.totalorder %v213, %v567
        %vm570 = vcmp.eq.s32.totalorder %v214, %v567
        %vm571 = vcmp.eq.s32.totalorder %v215, %v567
        %vm572 = vcmp.eq.s32.totalorder %v216, %v567
        %vm573 = vcmp.eq.s32.totalorder %v217, %v567
        %vm574 = vcmp.eq.s32.totalorder %v218, %v567
        %vm575 = vcmp.eq.s32.totalorder %v219, %v567
        %vm576 = vcmp.eq.s32.totalorder %v220, %v567
        %vm577 = vcmp.eq.s32.totalorder %v221, %v567
        %vm578 = vcmp.eq.s32.totalorder %v222, %v567
        %vm579 = vcmp.eq.s32.totalorder %v223, %v567
        %vm580 = vcmp.eq.s32.totalorder %v224, %v567
        %vm581 = vcmp.eq.s32.totalorder %v225, %v567
        %vm582 = vcmp.eq.s32.totalorder %v226, %v567
        %vm583 = vcmp.eq.s32.totalorder %v227, %v567
        %vm584 = vcmp.eq.s32.totalorder %v228, %v567
        %vm585 = vcmp.eq.s32.totalorder %v229, %v567
        %vm586 = vcmp.eq.s32.totalorder %v230, %v567
        %vm587 = vcmp.eq.s32.totalorder %v231, %v567
        %vm588 = vcmp.eq.s32.totalorder %v232, %v567
        %vm589 = vcmp.eq.s32.totalorder %v233, %v567
        %vm590 = vcmp.eq.s32.totalorder %v234, %v567
        %vm591 = vcmp.eq.s32.totalorder %v235, %v567
        %vm592 = vcmp.eq.s32.totalorder %v236, %v567
        %vm593 = vcmp.eq.s32.totalorder %v237, %v567
        %vm594 = vcmp.eq.s32.totalorder %v238, %v567
        %vm595 = vcmp.eq.s32.totalorder %v239, %v567
        %vm596 = vcmp.eq.s32.totalorder %v240, %v567
        %vm597 = vcmp.eq.s32.totalorder %v241, %v567
        %vm598 = vcmp.eq.s32.totalorder %v242, %v567
        %vm599 = vcmp.eq.s32.totalorder %v243, %v567
        %v600 = vlaneseq
        %v601 = vshrl.u32 %v600, 7
        %v602 = vsub.s32 0, %v601
        %v603 = vrot.slane %v563, %v602
        %v604 = vsel %vm568, %v603, 0.0
        %v605 = vsel %vm569, %v603, 0.0
        %v606 = vsel %vm570, %v603, 0.0
        %v607 = vsel %vm571, %v603, 0.0
        %v608 = vsel %vm572, %v603, 0.0
        %v609 = vsel %vm573, %v603, 0.0
        %v610 = vsel %vm574, %v603, 0.0
        %v611 = vsel %vm575, %v603, 0.0
        %v612 = vsel %vm576, %v603, 0.0
        %v613 = vsel %vm577, %v603, 0.0
        %v614 = vsel %vm578, %v603, 0.0
        %v615 = vsel %vm579, %v603, 0.0
        %v616 = vsel %vm580, %v603, 0.0
        %v617 = vsel %vm581, %v603, 0.0
        %v618 = vsel %vm582, %v603, 0.0
        %v619 = vsel %vm583, %v603, 0.0
        %v620 = vsel %vm584, %v603, 0.0
        %v621 = vsel %vm585, %v603, 0.0
        %v622 = vsel %vm586, %v603, 0.0
        %v623 = vsel %vm587, %v603, 0.0
        %v624 = vsel %vm588, %v603, 0.0
        %v625 = vsel %vm589, %v603, 0.0
        %v626 = vsel %vm590, %v603, 0.0
        %v627 = vsel %vm591, %v603, 0.0
        %v628 = vsel %vm592, %v603, 0.0
        %v629 = vsel %vm593, %v603, 0.0
        %v630 = vsel %vm594, %v603, 0.0
        %v631 = vsel %vm595, %v603, 0.0
        %v632 = vsel %vm596, %v603, 0.0
        %v633 = vsel %vm597, %v603, 0.0
        %v634 = vsel %vm598, %v603, 0.0
        %v635 = vsel %vm599, %v603, 0.0
        %v636 = vadd.f32 %v530, %v604
        %v637 = vadd.f32 %v531, %v605
        %v638 = vadd.f32 %v532, %v606
        %v639 = vadd.f32 %v533, %v607
        %v640 = vadd.f32 %v534, %v608
        %v641 = vadd.f32 %v535, %v609
        %v642 = vadd.f32 %v536, %v610
        %v643 = vadd.f32 %v537, %v611
        %v644 = vadd.f32 %v538, %v612
        %v645 = vadd.f32 %v539, %v613
        %v646 = vadd.f32 %v540, %v614
        %v647 = vadd.f32 %v541, %v615
        %v648 = vadd.f32 %v542, %v616
        %v649 = vadd.f32 %v543, %v617
        %v650 = vadd.f32 %v544, %v618
        %v651 = vadd.f32 %v545, %v619
        %v652 = vadd.f32 %v546, %v620
        %v653 = vadd.f32 %v547, %v621
        %v654 = vadd.f32 %v548, %v622
        %v655 = vadd.f32 %v549, %v623
        %v656 = vadd.f32 %v550, %v624
        %v657 = vadd.f32 %v551, %v625
        %v658 = vadd.f32 %v552, %v626
        %v659 = vadd.f32 %v553, %v627
        %v660 = vadd.f32 %v554, %v628
        %v661 = vadd.f32 %v555, %v629
        %v662 = vadd.f32 %v556, %v630
        %v663 = vadd.f32 %v557, %v631
        %v664 = vadd.f32 %v558, %v632
        %v665 = vadd.f32 %v559, %v633
        %v666 = vadd.f32 %v560, %v634
        %v667 = vadd.f32 %v561, %v635
        %v668 = vld [vmem:[#allocation2 + $0x4] sm:$0x1]
        %v669 = vld [vmem:[#allocation5 + $0x4] sm:$0x1]
        %v670 = vlaneseq
        %v671 = vshrl.u32 %v670, 7
        %v672 = vsub.s32 0, %v671
        %v673 = vrot.slane %v668, %v672
        %vm674 = vcmp.eq.s32.totalorder %v212, %v673
        %vm675 = vcmp.eq.s32.totalorder %v213, %v673
        %vm676 = vcmp.eq.s32.totalorder %v214, %v673
        %vm677 = vcmp.eq.s32.totalorder %v215, %v673
        %vm678 = vcmp.eq.s32.totalorder %v216, %v673
        %vm679 = vcmp.eq.s32.totalorder %v217, %v673
        %vm680 = vcmp.eq.s32.totalorder %v218, %v673
        %vm681 = vcmp.eq.s32.totalorder %v219, %v673
        %vm682 = vcmp.eq.s32.totalorder %v220, %v673
        %vm683 = vcmp.eq.s32.totalorder %v221, %v673
        %vm684 = vcmp.eq.s32.totalorder %v222, %v673
        %vm685 = vcmp.eq.s32.totalorder %v223, %v673
        %vm686 = vcmp.eq.s32.totalorder %v224, %v673
        %vm687 = vcmp.eq.s32.totalorder %v225, %v673
        %vm688 = vcmp.eq.s32.totalorder %v226, %v673
        %vm689 = vcmp.eq.s32.totalorder %v227, %v673
        %vm690 = vcmp.eq.s32.totalorder %v228, %v673
        %vm691 = vcmp.eq.s32.totalorder %v229, %v673
        %vm692 = vcmp.eq.s32.totalorder %v230, %v673
        %vm693 = vcmp.eq.s32.totalorder %v231, %v673
        %vm694 = vcmp.eq.s32.totalorder %v232, %v673
        %vm695 = vcmp.eq.s32.totalorder %v233, %v673
        %vm696 = vcmp.eq.s32.totalorder %v234, %v673
        %vm697 = vcmp.eq.s32.totalorder %v235, %v673
        %vm698 = vcmp.eq.s32.totalorder %v236, %v673
        %vm699 = vcmp.eq.s32.totalorder %v237, %v673
        %vm700 = vcmp.eq.s32.totalorder %v238, %v673
        %vm701 = vcmp.eq.s32.totalorder %v239, %v673
        %vm702 = vcmp.eq.s32.totalorder %v240, %v673
        %vm703 = vcmp.eq.s32.totalorder %v241, %v673
        %vm704 = vcmp.eq.s32.totalorder %v242, %v673
        %vm705 = vcmp.eq.s32.totalorder %v243, %v673
        %v706 = vlaneseq
        %v707 = vshrl.u32 %v706, 7
        %v708 = vsub.s32 0, %v707
        %v709 = vrot.slane %v669, %v708
        %v710 = vsel %vm674, %v709, 0.0
        %v711 = vsel %vm675, %v709, 0.0
        %v712 = vsel %vm676, %v709, 0.0
        %v713 = vsel %vm677, %v709, 0.0
        %v714 = vsel %vm678, %v709, 0.0
        %v715 = vsel %vm679, %v709, 0.0
        %v716 = vsel %vm680, %v709, 0.0
        %v717 = vsel %vm681, %v709, 0.0
        %v718 = vsel %vm682, %v709, 0.0
        %v719 = vsel %vm683, %v709, 0.0
        %v720 = vsel %vm684, %v709, 0.0
        %v721 = vsel %vm685, %v709, 0.0
        %v722 = vsel %vm686, %v709, 0.0
        %v723 = vsel %vm687, %v709, 0.0
        %v724 = vsel %vm688, %v709, 0.0
        %v725 = vsel %vm689, %v709, 0.0
        %v726 = vsel %vm690, %v709, 0.0
        %v727 = vsel %vm691, %v709, 0.0
        %v728 = vsel %vm692, %v709, 0.0
        %v729 = vsel %vm693, %v709, 0.0
        %v730 = vsel %vm694, %v709, 0.0
        %v731 = vsel %vm695, %v709, 0.0
        %v732 = vsel %vm696, %v709, 0.0
        %v733 = vsel %vm697, %v709, 0.0
        %v734 = vsel %vm698, %v709, 0.0
        %v735 = vsel %vm699, %v709, 0.0
        %v736 = vsel %vm700, %v709, 0.0
        %v737 = vsel %vm701, %v709, 0.0
        %v738 = vsel %vm702, %v709, 0.0
        %v739 = vsel %vm703, %v709, 0.0
        %v740 = vsel %vm704, %v709, 0.0
        %v741 = vsel %vm705, %v709, 0.0
        %v742 = vadd.f32 %v636, %v710
        %v743 = vadd.f32 %v637, %v711
        %v744 = vadd.f32 %v638, %v712
        %v745 = vadd.f32 %v639, %v713
        %v746 = vadd.f32 %v640, %v714
        %v747 = vadd.f32 %v641, %v715
        %v748 = vadd.f32 %v642, %v716
        %v749 = vadd.f32 %v643, %v717
        %v750 = vadd.f32 %v644, %v718
        %v751 = vadd.f32 %v645, %v719
        %v752 = vadd.f32 %v646, %v720
        %v753 = vadd.f32 %v647, %v721
        %v754 = vadd.f32 %v648, %v722
        %v755 = vadd.f32 %v649, %v723
        %v756 = vadd.f32 %v650, %v724
        %v757 = vadd.f32 %v651, %v725
        %v758 = vadd.f32 %v652, %v726
        %v759 = vadd.f32 %v653, %v727
        %v760 = vadd.f32 %v654, %v728
        %v761 = vadd.f32 %v655, %v729
        %v762 = vadd.f32 %v656, %v730
        %v763 = vadd.f32 %v657, %v731
        %v764 = vadd.f32 %v658, %v732
        %v765 = vadd.f32 %v659, %v733
        %v766 = vadd.f32 %v660, %v734
        %v767 = vadd.f32 %v661, %v735
        %v768 = vadd.f32 %v662, %v736
        %v769 = vadd.f32 %v663, %v737
        %v770 = vadd.f32 %v664, %v738
        %v771 = vadd.f32 %v665, %v739
        %v772 = vadd.f32 %v666, %v740
        %v773 = vadd.f32 %v667, %v741
        %v774 = vld [vmem:[#allocation2 + $0x5] sm:$0x1]
        %v775 = vld [vmem:[#allocation5 + $0x5] sm:$0x1]
        %v776 = vlaneseq
        %v777 = vshrl.u32 %v776, 7
        %v778 = vsub.s32 0, %v777
        %v779 = vrot.slane %v774, %v778
        %vm780 = vcmp.eq.s32.totalorder %v212, %v779
        %vm781 = vcmp.eq.s32.totalorder %v213, %v779
        %vm782 = vcmp.eq.s32.totalorder %v214, %v779
        %vm783 = vcmp.eq.s32.totalorder %v215, %v779
        %vm784 = vcmp.eq.s32.totalorder %v216, %v779
        %vm785 = vcmp.eq.s32.totalorder %v217, %v779
        %vm786 = vcmp.eq.s32.totalorder %v218, %v779
        %vm787 = vcmp.eq.s32.totalorder %v219, %v779
        %vm788 = vcmp.eq.s32.totalorder %v220, %v779
        %vm789 = vcmp.eq.s32.totalorder %v221, %v779
        %vm790 = vcmp.eq.s32.totalorder %v222, %v779
        %vm791 = vcmp.eq.s32.totalorder %v223, %v779
        %vm792 = vcmp.eq.s32.totalorder %v224, %v779
        %vm793 = vcmp.eq.s32.totalorder %v225, %v779
        %vm794 = vcmp.eq.s32.totalorder %v226, %v779
        %vm795 = vcmp.eq.s32.totalorder %v227, %v779
        %vm796 = vcmp.eq.s32.totalorder %v228, %v779
        %vm797 = vcmp.eq.s32.totalorder %v229, %v779
        %vm798 = vcmp.eq.s32.totalorder %v230, %v779
        %vm799 = vcmp.eq.s32.totalorder %v231, %v779
        %vm800 = vcmp.eq.s32.totalorder %v232, %v779
        %vm801 = vcmp.eq.s32.totalorder %v233, %v779
        %vm802 = vcmp.eq.s32.totalorder %v234, %v779
        %vm803 = vcmp.eq.s32.totalorder %v235, %v779
        %vm804 = vcmp.eq.s32.totalorder %v236, %v779
        %vm805 = vcmp.eq.s32.totalorder %v237, %v779
        %vm806 = vcmp.eq.s32.totalorder %v238, %v779
        %vm807 = vcmp.eq.s32.totalorder %v239, %v779
        %vm808 = vcmp.eq.s32.totalorder %v240, %v779
        %vm809 = vcmp.eq.s32.totalorder %v241, %v779
        %vm810 = vcmp.eq.s32.totalorder %v242, %v779
        %vm811 = vcmp.eq.s32.totalorder %v243, %v779
        %v812 = vlaneseq
        %v813 = vshrl.u32 %v812, 7
        %v814 = vsub.s32 0, %v813
        %v815 = vrot.slane %v775, %v814
        %v816 = vsel %vm780, %v815, 0.0
        %v817 = vsel %vm781, %v815, 0.0
        %v818 = vsel %vm782, %v815, 0.0
        %v819 = vsel %vm783, %v815, 0.0
        %v820 = vsel %vm784, %v815, 0.0
        %v821 = vsel %vm785, %v815, 0.0
        %v822 = vsel %vm786, %v815, 0.0
        %v823 = vsel %vm787, %v815, 0.0
        %v824 = vsel %vm788, %v815, 0.0
        %v825 = vsel %vm789, %v815, 0.0
        %v826 = vsel %vm790, %v815, 0.0
        %v827 = vsel %vm791, %v815, 0.0
        %v828 = vsel %vm792, %v815, 0.0
        %v829 = vsel %vm793, %v815, 0.0
        %v830 = vsel %vm794, %v815, 0.0
        %v831 = vsel %vm795, %v815, 0.0
        %v832 = vsel %vm796, %v815, 0.0
        %v833 = vsel %vm797, %v815, 0.0
        %v834 = vsel %vm798, %v815, 0.0
        %v835 = vsel %vm799, %v815, 0.0
        %v836 = vsel %vm800, %v815, 0.0
        %v837 = vsel %vm801, %v815, 0.0
        %v838 = vsel %vm802, %v815, 0.0
        %v839 = vsel %vm803, %v815, 0.0
        %v840 = vsel %vm804, %v815, 0.0
        %v841 = vsel %vm805, %v815, 0.0
        %v842 = vsel %vm806, %v815, 0.0
        %v843 = vsel %vm807, %v815, 0.0
        %v844 = vsel %vm808, %v815, 0.0
        %v845 = vsel %vm809, %v815, 0.0
        %v846 = vsel %vm810, %v815, 0.0
        %v847 = vsel %vm811, %v815, 0.0
        %v848 = vadd.f32 %v742, %v816
        %v849 = vadd.f32 %v743, %v817
        %v850 = vadd.f32 %v744, %v818
        %v851 = vadd.f32 %v745, %v819
        %v852 = vadd.f32 %v746, %v820
        %v853 = vadd.f32 %v747, %v821
        %v854 = vadd.f32 %v748, %v822
        %v855 = vadd.f32 %v749, %v823
        %v856 = vadd.f32 %v750, %v824
        %v857 = vadd.f32 %v751, %v825
        %v858 = vadd.f32 %v752, %v826
        %v859 = vadd.f32 %v753, %v827
        %v860 = vadd.f32 %v754, %v828
        %v861 = vadd.f32 %v755, %v829
        %v862 = vadd.f32 %v756, %v830
        %v863 = vadd.f32 %v757, %v831
        %v864 = vadd.f32 %v758, %v832
        %v865 = vadd.f32 %v759, %v833
        %v866 = vadd.f32 %v760, %v834
        %v867 = vadd.f32 %v761, %v835
        %v868 = vadd.f32 %v762, %v836
        %v869 = vadd.f32 %v763, %v837
        %v870 = vadd.f32 %v764, %v838
        %v871 = vadd.f32 %v765, %v839
        %v872 = vadd.f32 %v766, %v840
        %v873 = vadd.f32 %v767, %v841
        %v874 = vadd.f32 %v768, %v842
        %v875 = vadd.f32 %v769, %v843
        %v876 = vadd.f32 %v770, %v844
        %v877 = vadd.f32 %v771, %v845
        %v878 = vadd.f32 %v772, %v846
        %v879 = vadd.f32 %v773, %v847
        %v880 = vld [vmem:[#allocation2 + $0x6] sm:$0x1]
        %v881 = vld [vmem:[#allocation5 + $0x6] sm:$0x1]
        %v882 = vlaneseq
        %v883 = vshrl.u32 %v882, 7
        %v884 = vsub.s32 0, %v883
        %v885 = vrot.slane %v880, %v884
        %vm886 = vcmp.eq.s32.totalorder %v212, %v885
        %vm887 = vcmp.eq.s32.totalorder %v213, %v885
        %vm888 = vcmp.eq.s32.totalorder %v214, %v885
        %vm889 = vcmp.eq.s32.totalorder %v215, %v885
        %vm890 = vcmp.eq.s32.totalorder %v216, %v885
        %vm891 = vcmp.eq.s32.totalorder %v217, %v885
        %vm892 = vcmp.eq.s32.totalorder %v218, %v885
        %vm893 = vcmp.eq.s32.totalorder %v219, %v885
        %vm894 = vcmp.eq.s32.totalorder %v220, %v885
        %vm895 = vcmp.eq.s32.totalorder %v221, %v885
        %vm896 = vcmp.eq.s32.totalorder %v222, %v885
        %vm897 = vcmp.eq.s32.totalorder %v223, %v885
        %vm898 = vcmp.eq.s32.totalorder %v224, %v885
        %vm899 = vcmp.eq.s32.totalorder %v225, %v885
        %vm900 = vcmp.eq.s32.totalorder %v226, %v885
        %vm901 = vcmp.eq.s32.totalorder %v227, %v885
        %vm902 = vcmp.eq.s32.totalorder %v228, %v885
        %vm903 = vcmp.eq.s32.totalorder %v229, %v885
        %vm904 = vcmp.eq.s32.totalorder %v230, %v885
        %vm905 = vcmp.eq.s32.totalorder %v231, %v885
        %vm906 = vcmp.eq.s32.totalorder %v232, %v885
        %vm907 = vcmp.eq.s32.totalorder %v233, %v885
        %vm908 = vcmp.eq.s32.totalorder %v234, %v885
        %vm909 = vcmp.eq.s32.totalorder %v235, %v885
        %vm910 = vcmp.eq.s32.totalorder %v236, %v885
        %vm911 = vcmp.eq.s32.totalorder %v237, %v885
        %vm912 = vcmp.eq.s32.totalorder %v238, %v885
        %vm913 = vcmp.eq.s32.totalorder %v239, %v885
        %vm914 = vcmp.eq.s32.totalorder %v240, %v885
        %vm915 = vcmp.eq.s32.totalorder %v241, %v885
        %vm916 = vcmp.eq.s32.totalorder %v242, %v885
        %vm917 = vcmp.eq.s32.totalorder %v243, %v885
        %v918 = vlaneseq
        %v919 = vshrl.u32 %v918, 7
        %v920 = vsub.s32 0, %v919
        %v921 = vrot.slane %v881, %v920
        %v922 = vsel %vm886, %v921, 0.0
        %v923 = vsel %vm887, %v921, 0.0
        %v924 = vsel %vm888, %v921, 0.0
        %v925 = vsel %vm889, %v921, 0.0
        %v926 = vsel %vm890, %v921, 0.0
        %v927 = vsel %vm891, %v921, 0.0
        %v928 = vsel %vm892, %v921, 0.0
        %v929 = vsel %vm893, %v921, 0.0
        %v930 = vsel %vm894, %v921, 0.0
        %v931 = vsel %vm895, %v921, 0.0
        %v932 = vsel %vm896, %v921, 0.0
        %v933 = vsel %vm897, %v921, 0.0
        %v934 = vsel %vm898, %v921, 0.0
        %v935 = vsel %vm899, %v921, 0.0
        %v936 = vsel %vm900, %v921, 0.0
        %v937 = vsel %vm901, %v921, 0.0
        %v938 = vsel %vm902, %v921, 0.0
        %v939 = vsel %vm903, %v921, 0.0
        %v940 = vsel %vm904, %v921, 0.0
        %v941 = vsel %vm905, %v921, 0.0
        %v942 = vsel %vm906, %v921, 0.0
        %v943 = vsel %vm907, %v921, 0.0
        %v944 = vsel %vm908, %v921, 0.0
        %v945 = vsel %vm909, %v921, 0.0
        %v946 = vsel %vm910, %v921, 0.0
        %v947 = vsel %vm911, %v921, 0.0
        %v948 = vsel %vm912, %v921, 0.0
        %v949 = vsel %vm913, %v921, 0.0
        %v950 = vsel %vm914, %v921, 0.0
        %v951 = vsel %vm915, %v921, 0.0
        %v952 = vsel %vm916, %v921, 0.0
        %v953 = vsel %vm917, %v921, 0.0
        %v954 = vadd.f32 %v848, %v922
        %v955 = vadd.f32 %v849, %v923
        %v956 = vadd.f32 %v850, %v924
        %v957 = vadd.f32 %v851, %v925
        %v958 = vadd.f32 %v852, %v926
        %v959 = vadd.f32 %v853, %v927
        %v960 = vadd.f32 %v854, %v928
        %v961 = vadd.f32 %v855, %v929
        %v962 = vadd.f32 %v856, %v930
        %v963 = vadd.f32 %v857, %v931
        %v964 = vadd.f32 %v858, %v932
        %v965 = vadd.f32 %v859, %v933
        %v966 = vadd.f32 %v860, %v934
        %v967 = vadd.f32 %v861, %v935
        %v968 = vadd.f32 %v862, %v936
        %v969 = vadd.f32 %v863, %v937
        %v970 = vadd.f32 %v864, %v938
        %v971 = vadd.f32 %v865, %v939
        %v972 = vadd.f32 %v866, %v940
        %v973 = vadd.f32 %v867, %v941
        %v974 = vadd.f32 %v868, %v942
        %v975 = vadd.f32 %v869, %v943
        %v976 = vadd.f32 %v870, %v944
        %v977 = vadd.f32 %v871, %v945
        %v978 = vadd.f32 %v872, %v946
        %v979 = vadd.f32 %v873, %v947
        %v980 = vadd.f32 %v874, %v948
        %v981 = vadd.f32 %v875, %v949
        %v982 = vadd.f32 %v876, %v950
        %v983 = vadd.f32 %v877, %v951
        %v984 = vadd.f32 %v878, %v952
        %v985 = vadd.f32 %v879, %v953
        %v986 = vld [vmem:[#allocation2 + $0x7] sm:$0x1]
        %v987 = vld [vmem:[#allocation5 + $0x7] sm:$0x1]
        %v988 = vlaneseq
        %v989 = vshrl.u32 %v988, 7
        %v990 = vsub.s32 0, %v989
        %v991 = vrot.slane %v986, %v990
        %vm992 = vcmp.eq.s32.totalorder %v212, %v991
        %vm993 = vcmp.eq.s32.totalorder %v213, %v991
        %vm994 = vcmp.eq.s32.totalorder %v214, %v991
        %vm995 = vcmp.eq.s32.totalorder %v215, %v991
        %vm996 = vcmp.eq.s32.totalorder %v216, %v991
        %vm997 = vcmp.eq.s32.totalorder %v217, %v991
        %vm998 = vcmp.eq.s32.totalorder %v218, %v991
        %vm999 = vcmp.eq.s32.totalorder %v219, %v991
        %vm1000 = vcmp.eq.s32.totalorder %v220, %v991
        %vm1001 = vcmp.eq.s32.totalorder %v221, %v991
        %vm1002 = vcmp.eq.s32.totalorder %v222, %v991
        %vm1003 = vcmp.eq.s32.totalorder %v223, %v991
        %vm1004 = vcmp.eq.s32.totalorder %v224, %v991
        %vm1005 = vcmp.eq.s32.totalorder %v225, %v991
        %vm1006 = vcmp.eq.s32.totalorder %v226, %v991
        %vm1007 = vcmp.eq.s32.totalorder %v227, %v991
        %vm1008 = vcmp.eq.s32.totalorder %v228, %v991
        %vm1009 = vcmp.eq.s32.totalorder %v229, %v991
        %vm1010 = vcmp.eq.s32.totalorder %v230, %v991
        %vm1011 = vcmp.eq.s32.totalorder %v231, %v991
        %vm1012 = vcmp.eq.s32.totalorder %v232, %v991
        %vm1013 = vcmp.eq.s32.totalorder %v233, %v991
        %vm1014 = vcmp.eq.s32.totalorder %v234, %v991
        %vm1015 = vcmp.eq.s32.totalorder %v235, %v991
        %vm1016 = vcmp.eq.s32.totalorder %v236, %v991
        %vm1017 = vcmp.eq.s32.totalorder %v237, %v991
        %vm1018 = vcmp.eq.s32.totalorder %v238, %v991
        %vm1019 = vcmp.eq.s32.totalorder %v239, %v991
        %vm1020 = vcmp.eq.s32.totalorder %v240, %v991
        %vm1021 = vcmp.eq.s32.totalorder %v241, %v991
        %vm1022 = vcmp.eq.s32.totalorder %v242, %v991
        %vm1023 = vcmp.eq.s32.totalorder %v243, %v991
        %v1024 = vlaneseq
        %v1025 = vshrl.u32 %v1024, 7
        %v1026 = vsub.s32 0, %v1025
        %v1027 = vrot.slane %v987, %v1026
        %v1028 = vsel %vm992, %v1027, 0.0
        %v1029 = vsel %vm993, %v1027, 0.0
        %v1030 = vsel %vm994, %v1027, 0.0
        %v1031 = vsel %vm995, %v1027, 0.0
        %v1032 = vsel %vm996, %v1027, 0.0
        %v1033 = vsel %vm997, %v1027, 0.0
        %v1034 = vsel %vm998, %v1027, 0.0
        %v1035 = vsel %vm999, %v1027, 0.0
        %v1036 = vsel %vm1000, %v1027, 0.0
        %v1037 = vsel %vm1001, %v1027, 0.0
        %v1038 = vsel %vm1002, %v1027, 0.0
        %v1039 = vsel %vm1003, %v1027, 0.0
        %v1040 = vsel %vm1004, %v1027, 0.0
        %v1041 = vsel %vm1005, %v1027, 0.0
        %v1042 = vsel %vm1006, %v1027, 0.0
        %v1043 = vsel %vm1007, %v1027, 0.0
        %v1044 = vsel %vm1008, %v1027, 0.0
        %v1045 = vsel %vm1009, %v1027, 0.0
        %v1046 = vsel %vm1010, %v1027, 0.0
        %v1047 = vsel %vm1011, %v1027, 0.0
        %v1048 = vsel %vm1012, %v1027, 0.0
        %v1049 = vsel %vm1013, %v1027, 0.0
        %v1050 = vsel %vm1014, %v1027, 0.0
        %v1051 = vsel %vm1015, %v1027, 0.0
        %v1052 = vsel %vm1016, %v1027, 0.0
        %v1053 = vsel %vm1017, %v1027, 0.0
        %v1054 = vsel %vm1018, %v1027, 0.0
        %v1055 = vsel %vm1019, %v1027, 0.0
        %v1056 = vsel %vm1020, %v1027, 0.0
        %v1057 = vsel %vm1021, %v1027, 0.0
        %v1058 = vsel %vm1022, %v1027, 0.0
        %v1059 = vsel %vm1023, %v1027, 0.0
        %v1060 = vadd.f32 %v954, %v1028
        %v1061 = vadd.f32 %v955, %v1029
        %v1062 = vadd.f32 %v956, %v1030
        %v1063 = vadd.f32 %v957, %v1031
        %v1064 = vadd.f32 %v958, %v1032
        %v1065 = vadd.f32 %v959, %v1033
        %v1066 = vadd.f32 %v960, %v1034
        %v1067 = vadd.f32 %v961, %v1035
        %v1068 = vadd.f32 %v962, %v1036
        %v1069 = vadd.f32 %v963, %v1037
        %v1070 = vadd.f32 %v964, %v1038
        %v1071 = vadd.f32 %v965, %v1039
        %v1072 = vadd.f32 %v966, %v1040
        %v1073 = vadd.f32 %v967, %v1041
        %v1074 = vadd.f32 %v968, %v1042
        %v1075 = vadd.f32 %v969, %v1043
        %v1076 = vadd.f32 %v970, %v1044
        %v1077 = vadd.f32 %v971, %v1045
        %v1078 = vadd.f32 %v972, %v1046
        %v1079 = vadd.f32 %v973, %v1047
        %v1080 = vadd.f32 %v974, %v1048
        %v1081 = vadd.f32 %v975, %v1049
        %v1082 = vadd.f32 %v976, %v1050
        %v1083 = vadd.f32 %v977, %v1051
        %v1084 = vadd.f32 %v978, %v1052
        %v1085 = vadd.f32 %v979, %v1053
        %v1086 = vadd.f32 %v980, %v1054
        %v1087 = vadd.f32 %v981, %v1055
        %v1088 = vadd.f32 %v982, %v1056
        %v1089 = vadd.f32 %v983, %v1057
        %v1090 = vadd.f32 %v984, %v1058
        %v1091 = vadd.f32 %v985, %v1059
        %v1092 = vpack.c.bf16 %v1061, %v1060
        %v1093 = vpack.c.bf16 %v1063, %v1062
        %v1094 = vpack.c.bf16 %v1065, %v1064
        %v1095 = vpack.c.bf16 %v1067, %v1066
        %v1096 = vpack.c.bf16 %v1069, %v1068
        %v1097 = vpack.c.bf16 %v1071, %v1070
        %v1098 = vpack.c.bf16 %v1073, %v1072
        %v1099 = vpack.c.bf16 %v1075, %v1074
        %v1100 = vpack.c.bf16 %v1077, %v1076
        %v1101 = vpack.c.bf16 %v1079, %v1078
        %v1102 = vpack.c.bf16 %v1081, %v1080
        %v1103 = vpack.c.bf16 %v1083, %v1082
        %v1104 = vpack.c.bf16 %v1085, %v1084
        %v1105 = vpack.c.bf16 %v1087, %v1086
        %v1106 = vpack.c.bf16 %v1089, %v1088
        %v1107 = vpack.c.bf16 %v1091, %v1090
        %v1124 = vunpack.c.l.b16 %v1092
        %v1125 = vunpack.c.h.b16 %v1092
        %v1126 = vunpack.c.l.b16 %v1093
        %v1127 = vunpack.c.h.b16 %v1093
        %v1128 = vunpack.c.l.b16 %v1094
        %v1129 = vunpack.c.h.b16 %v1094
        %v1130 = vunpack.c.l.b16 %v1095
        %v1131 = vunpack.c.h.b16 %v1095
        %v1132 = vunpack.c.l.b16 %v1096
        %v1133 = vunpack.c.h.b16 %v1096
        %v1134 = vunpack.c.l.b16 %v1097
        %v1135 = vunpack.c.h.b16 %v1097
        %v1136 = vunpack.c.l.b16 %v1098
        %v1137 = vunpack.c.h.b16 %v1098
        %v1138 = vunpack.c.l.b16 %v1099
        %v1139 = vunpack.c.h.b16 %v1099
        %v1140 = vunpack.c.l.b16 %v1100
        %v1141 = vunpack.c.h.b16 %v1100
        %v1142 = vunpack.c.l.b16 %v1101
        %v1143 = vunpack.c.h.b16 %v1101
        %v1144 = vunpack.c.l.b16 %v1102
        %v1145 = vunpack.c.h.b16 %v1102
        %v1146 = vunpack.c.l.b16 %v1103
        %v1147 = vunpack.c.h.b16 %v1103
        %v1148 = vunpack.c.l.b16 %v1104
        %v1149 = vunpack.c.h.b16 %v1104
        %v1150 = vunpack.c.l.b16 %v1105
        %v1151 = vunpack.c.h.b16 %v1105
        %v1152 = vunpack.c.l.b16 %v1106
        %v1153 = vunpack.c.h.b16 %v1106
        %v1154 = vunpack.c.l.b16 %v1107
        %v1155 = vunpack.c.h.b16 %v1107
        %v1156 = vpack.c.b16 %v1124, %v1124
        %v1157 = vpack.c.b16 %v1125, %v1125
        %v1158 = vpack.c.b16 %v1126, %v1126
        %v1159 = vpack.c.b16 %v1127, %v1127
        %v1160 = vpack.c.b16 %v1128, %v1128
        %v1161 = vpack.c.b16 %v1129, %v1129
        %v1162 = vpack.c.b16 %v1130, %v1130
        %v1163 = vpack.c.b16 %v1131, %v1131
        %v1164 = vpack.c.b16 %v1132, %v1132
        %v1165 = vpack.c.b16 %v1133, %v1133
        %v1166 = vpack.c.b16 %v1134, %v1134
        %v1167 = vpack.c.b16 %v1135, %v1135
        %v1168 = vpack.c.b16 %v1136, %v1136
        %v1169 = vpack.c.b16 %v1137, %v1137
        %v1170 = vpack.c.b16 %v1138, %v1138
        %v1171 = vpack.c.b16 %v1139, %v1139
        %v1172 = vpack.c.b16 %v1140, %v1140
        %v1173 = vpack.c.b16 %v1141, %v1141
        %v1174 = vpack.c.b16 %v1142, %v1142
        %v1175 = vpack.c.b16 %v1143, %v1143
        %v1176 = vpack.c.b16 %v1144, %v1144
        %v1177 = vpack.c.b16 %v1145, %v1145
        %v1178 = vpack.c.b16 %v1146, %v1146
        %v1179 = vpack.c.b16 %v1147, %v1147
        %v1180 = vpack.c.b16 %v1148, %v1148
        %v1181 = vpack.c.b16 %v1149, %v1149
        %v1182 = vpack.c.b16 %v1150, %v1150
        %v1183 = vpack.c.b16 %v1151, %v1151
        %v1184 = vpack.c.b16 %v1152, %v1152
        %v1185 = vpack.c.b16 %v1153, %v1153
        %v1186 = vpack.c.b16 %v1154, %v1154
        %v1187 = vpack.c.b16 %v1155, %v1155
        %1220 = vst [vmem:[%s175] sm:$0xf] %v1156
        %1221 = vst [vmem:[%s175 + $0x4] sm:$0xf] %v1157
        %1222 = vst [vmem:[%s175 + $0x8] sm:$0xf] %v1158
        %1223 = vst [vmem:[%s175 + $0xc] sm:$0xf] %v1159
        %1224 = vst [vmem:[%s175 + $0x10] sm:$0xf] %v1160
        %1225 = vst [vmem:[%s175 + $0x14] sm:$0xf] %v1161
        %1226 = vst [vmem:[%s175 + $0x18] sm:$0xf] %v1162
        %1227 = vst [vmem:[%s175 + $0x1c] sm:$0xf] %v1163
        %1228 = vst [vmem:[%s175 + $0x20] sm:$0xf] %v1164
        %1229 = vst [vmem:[%s175 + $0x24] sm:$0xf] %v1165
        %1230 = vst [vmem:[%s175 + $0x28] sm:$0xf] %v1166
        %1231 = vst [vmem:[%s175 + $0x2c] sm:$0xf] %v1167
        %1232 = vst [vmem:[%s175 + $0x30] sm:$0xf] %v1168
        %1233 = vst [vmem:[%s175 + $0x34] sm:$0xf] %v1169
        %1234 = vst [vmem:[%s175 + $0x38] sm:$0xf] %v1170
        %1235 = vst [vmem:[%s175 + $0x3c] sm:$0xf] %v1171
        %1236 = vst [vmem:[%s175 + $0x40] sm:$0xf] %v1172
        %1237 = vst [vmem:[%s175 + $0x44] sm:$0xf] %v1173
        %1238 = vst [vmem:[%s175 + $0x48] sm:$0xf] %v1174
        %1239 = vst [vmem:[%s175 + $0x4c] sm:$0xf] %v1175
        %1240 = vst [vmem:[%s175 + $0x50] sm:$0xf] %v1176
        %1241 = vst [vmem:[%s175 + $0x54] sm:$0xf] %v1177
        %1242 = vst [vmem:[%s175 + $0x58] sm:$0xf] %v1178
        %1243 = vst [vmem:[%s175 + $0x5c] sm:$0xf] %v1179
        %1244 = vst [vmem:[%s175 + $0x60] sm:$0xf] %v1180
        %1245 = vst [vmem:[%s175 + $0x64] sm:$0xf] %v1181
        %1246 = vst [vmem:[%s175 + $0x68] sm:$0xf] %v1182
        %1247 = vst [vmem:[%s175 + $0x6c] sm:$0xf] %v1183
        %1248 = vst [vmem:[%s175 + $0x70] sm:$0xf] %v1184
        %1249 = vst [vmem:[%s175 + $0x74] sm:$0xf] %v1185
        %1250 = vst [vmem:[%s175 + $0x78] sm:$0xf] %v1186
        %1251 = vst [vmem:[%s175 + $0x7c] sm:$0xf] %v1187
        %s1252 = sand.u32 %s92, 1
        %s1253 = scalar_lea.sflag [#allocation4], %s1252
        %s1254 = sand.u32 %s92, 1
        %s1255 = smul.addr %s1254, 128
        %s1256 = scalar_lea.vmem [#allocation7], %s1255
        // Predicated region
        $region37: #{tpu_custom_call.1} parent=27 // pred_check
          %p1257 = pneg %p102
        $region38: #{tpu_custom_call.1} parent=27 // pred_check_branch
          %1259 = sbr.rel (%p1257) target = $region40
        $region39: #{tpu_custom_call.1} parent=27 // pred_region
          %s1260 = smul.u32 32, %s22
          %s1262 = ssub.s32 2048, 2048
          %1263 = vsyncadd %s1253, %s1262
          %s1264 = sadd.s32 %s23, %s1260
          %s1265 = smul.addr %s1264, 64
          %s1266 = scalar_lea.hbm %s2, %s1265
          %s1267 = sshll.u32 %s1256, 4
          %s1268 = int_to_ptr.vmem [resolvable:$true] %s1267
          %1273 = dma.vmem_to_hbm [thread:$0]  %s1268, 2048, %s1266, %s1253, 64, 64, 4
        $region40: #{tpu_custom_call.1} parent=27 // pred_fallthru
          _
      $region28: #{tpu_custom_call.1} parent=5 // pred_fallthru
        _
      %p1274 = scmp.le.s32.totalorder 2, %s13
      // Predicated region
      $region41: #{tpu_custom_call.1} parent=5 // pred_check
        %p1275 = pneg %p1274
      $region42: #{tpu_custom_call.1} parent=5 // pred_check_branch
        %1277 = sbr.rel (%p1275) target = $region44
      $region43: #{tpu_custom_call.1} parent=5 // pred_region
        %s1278 = ssub.s32 %s13, 2
        // Predicated region
        $region45: #{tpu_custom_call.1} parent=43 // pred_check
          %p1279 = pneg %p108
        $region46: #{tpu_custom_call.1} parent=43 // pred_check_branch
          %1281 = sbr.rel (%p1279) target = $region48
        $region47: #{tpu_custom_call.1} parent=43 // pred_region
          %s1282 = sand.u32 %s93, 1
          %s1283 = scalar_lea.sflag [#allocation4], %s1282
          %s1284 = sand.u32 %s93, 1
          %s1285 = smul.addr %s1284, 128
          %s1286 = scalar_lea.vmem [#allocation7], %s1285
          %1287 = dma.done %s1283, 2048
        $region48: #{tpu_custom_call.1} parent=43 // pred_fallthru
          _
      $region44: #{tpu_custom_call.1} parent=5 // pred_fallthru
        _
    $region6: #{tpu_custom_call.1} parent=1 // loop_footer
      %s17 = sadd.s32 1, %s13
    $region7: #{tpu_custom_call.1} parent=1 // loop_footer_branch
      %12 = sbr.rel target = $region3
    $region8: #{tpu_custom_call.1} parent=1 // loop_exit
      _
    %1288 = vsyncpa [#allocation3], 1
    %s1289 = scalar_lea.sflag [#allocation3], 1
    %1290 = vsyncpa %s1289, 1
    %1291 = vsyncpa [#allocation6], 1
    %1292 = vsyncpa [#allocation4], 1
    %s1293 = scalar_lea.sflag [#allocation4], 1
    %1294 = vsyncpa %s1293, 1

</llo_original>
